<compile_context>
chip_gen: v6e
topology: v6e:2x2x1
jax: 0.10.0
libtpu: 0.0.40
codegen_flags: <defaults>
</compile_context>

<pallas_src>
from functools import partial

import numpy as np
import jax
import jax.numpy as jnp
from jax.experimental import pallas as pl
from jax.experimental.pallas import tpu as pltpu

D_PAD = 128        # emb_dim padded to full lane width
F_PAD = 128        # raw-feature dim padded to full lane width
SUBLANE = 8        # f32 sublane quantum


# ---------------------------------------------------------------------------
# Single fused Pallas kernel: embeddings -> num_layers x HeteroConv(GraphConv)
# (sum + ReLU + residual) -> mean pooling.  Everything VMEM resident.
# ---------------------------------------------------------------------------
def _fused_vgnn_kernel(xr_ref, xv_ref,
                       ewr_ref, ebr_ref, ewv_ref, ebv_ref,
                       arr_ref, avr_ref, arv_ref, p_ref,
                       wr_ref, br_ref, wv_ref, bv_ref,
                       node_ref, graph_ref):
    f32 = jnp.float32

    # Node-type embeddings (LazyLinear per node type): h = x @ W^T + b
    h_r = jnp.dot(xr_ref[...], ewr_ref[...], preferred_element_type=f32) + ebr_ref[...]
    h_v = jnp.dot(xv_ref[...], ewv_ref[...], preferred_element_type=f32) + ebv_ref[...]

    a_rr = arr_ref[...]
    a_vr = avr_ref[...]
    a_rv = arv_ref[...]

    num_layers = wr_ref.shape[0]           # static (2)
    for l in range(num_layers):
        # scatter-mean message passing, pre-lowered to dense row-normalized A
        agg_rr = jnp.dot(a_rr, h_r, preferred_element_type=f32)   # real  -> real
        agg_vr = jnp.dot(a_vr, h_v, preferred_element_type=f32)   # virt  -> real
        agg_rv = jnp.dot(a_rv, h_r, preferred_element_type=f32)   # real  -> virt

        # One concatenated GEMM per destination node type:
        #   rel + root terms and the HeteroConv 'sum' over edge types are all
        #   folded into a single (rows, 3*128)@(3*128,128) / (rows,2*128)@(2*128,128)
        x_r = jnp.concatenate([agg_rr, agg_vr, h_r], axis=-1)     # (Nr, 3*D_PAD)
        x_v = jnp.concatenate([agg_rv, h_v], axis=-1)             # (Nv, 2*D_PAD)
        upd_r = jnp.dot(x_r, wr_ref[l], preferred_element_type=f32) + br_ref[l]
        upd_v = jnp.dot(x_v, wv_ref[l], preferred_element_type=f32) + bv_ref[l]

        # activation -> dropout (eval-mode identity) -> residual
        # TODO(synk): training-mode stochastic dropout not implemented (eval identity).
        h_r = h_r + jnp.maximum(upd_r, 0.0)
        h_v = h_v + jnp.maximum(upd_v, 0.0)

    node_ref[...] = h_r
    graph_ref[...] = jnp.dot(p_ref[...], h_r, preferred_element_type=f32)


def _spec(shape):
    zeros = (0,) * len(shape)
    return pl.BlockSpec(shape, lambda i, _z=zeros: _z)


@partial(jax.jit, static_argnames=("n_real", "n_graphs", "emb_dim"))
def virtual_gnn_forward(xr_pad, xv_pad, ewr, ebr, ewv, ebv,
                        a_rr, a_vr, a_rv, p_pad,
                        wr, br, wv, bv, *, n_real, n_graphs, emb_dim):
    """Fused VirtualGNN forward.  All inputs are pre-padded / pre-transposed."""
    arrays = (xr_pad, xv_pad, ewr, ebr, ewv, ebv, a_rr, a_vr, a_rv, p_pad,
              wr, br, wv, bv)
    nr = xr_pad.shape[0]
    nv = xv_pad.shape[0]
    g = p_pad.shape[0]
    d = ewr.shape[1]
    layers = wr.shape[0]

    # advisory cost estimate for the fused custom call
    flops = (2 * nr * ewr.shape[0] * d + 2 * nv * ewv.shape[0] * d
             + layers * (2 * nr * nr * d + 2 * nr * nv * d + 2 * nv * nr * d
                         + 2 * nr * (3 * d) * d + 2 * nv * (2 * d) * d)
             + 2 * g * nr * d)
    bytes_accessed = (sum(int(np.prod(a.shape)) * 4 for a in arrays)
                      + (nr + g) * d * 4)

    node_pad, graph_pad = pl.pallas_call(
        _fused_vgnn_kernel,
        out_shape=(jax.ShapeDtypeStruct((nr, d), jnp.float32),
                   jax.ShapeDtypeStruct((g, d), jnp.float32)),
        grid=(1,),
        in_specs=[_spec(a.shape) for a in arrays],
        out_specs=(_spec((nr, d)), _spec((g, d))),
        compiler_params=pltpu.CompilerParams(
            dimension_semantics=("arbitrary",)),
        cost_estimate=pl.CostEstimate(flops=int(flops), transcendentals=0,
                                      bytes_accessed=int(bytes_accessed)),
    )(*arrays)

    return {
        "node_embedding": node_pad[:n_real, :emb_dim],
        "graph_embedding": graph_pad[:n_graphs, :emb_dim],
    }


# ---------------------------------------------------------------------------
# One-time host-side parameter / graph preparation (transpose, concat, pad).
# ---------------------------------------------------------------------------
def _pad2(a, rows, cols):
    out = np.zeros((rows, cols), dtype=np.float32)
    a = np.asarray(a, dtype=np.float32)
    out[:a.shape[0], :a.shape[1]] = a
    return out


def prepare_params(params, emb_dim):
    D = emb_dim
    prep = {
        "ewr": jnp.asarray(_pad2(np.asarray(params["emb_real_w"]).T, F_PAD, D_PAD)),
        "ebr": jnp.asarray(_pad2(np.asarray(params["emb_real_b"]).reshape(1, -1), 1, D_PAD)),
        "ewv": jnp.asarray(_pad2(np.asarray(params["emb_virtual_w"]).T, F_PAD, D_PAD)),
        "ebv": jnp.asarray(_pad2(np.asarray(params["emb_virtual_b"]).reshape(1, -1), 1, D_PAD)),
    }
    wr_l, br_l, wv_l, bv_l = [], [], [], []
    for lp in params["layers"]:
        wrel_rr, brel_rr, wroot_rr = (np.asarray(t, np.float32) for t in lp["r_to_r"])
        wrel_vr, brel_vr, wroot_vr = (np.asarray(t, np.float32) for t in lp["v_to_r"])
        wrel_rv, brel_rv, wroot_rv = (np.asarray(t, np.float32) for t in lp["r_to_v"])

        # dst = real : concat([A_rr@h_r | A_vr@h_v | h_r]) @ Wr + (b_rr + b_vr)
        Wr = np.zeros((3 * D_PAD, D_PAD), np.float32)
        Wr[0:D, :D] = wrel_rr.T
        Wr[D_PAD:D_PAD + D, :D] = wrel_vr.T
        Wr[2 * D_PAD:2 * D_PAD + D, :D] = (wroot_rr + wroot_vr).T
        br = np.zeros((1, D_PAD), np.float32)
        br[0, :D] = brel_rr + brel_vr

        # dst = virtual : concat([A_rv@h_r | h_v]) @ Wv + b_rv
        Wv = np.zeros((2 * D_PAD, D_PAD), np.float32)
        Wv[0:D, :D] = wrel_rv.T
        Wv[D_PAD:D_PAD + D, :D] = wroot_rv.T
        bv = np.zeros((1, D_PAD), np.float32)
        bv[0, :D] = brel_rv

        wr_l.append(Wr); br_l.append(br); wv_l.append(Wv); bv_l.append(bv)

    prep["wr"] = jnp.asarray(np.stack(wr_l, axis=0))
    prep["br"] = jnp.asarray(np.stack(br_l, axis=0))
    prep["wv"] = jnp.asarray(np.stack(wv_l, axis=0))
    prep["bv"] = jnp.asarray(np.stack(bv_l, axis=0))
    return prep


# ---------------------------------------------------------------------------
# pure-JAX reference for validation (unpadded, per-relation math)
# ---------------------------------------------------------------------------
def ref_forward(params, x_real, x_virtual, A_rr, A_vr, A_rv, P):
    def lin(x, w, b):
        return x @ w.T + b

    def gc(a, xs, xd, wr, br, wo):
        return (a @ xs) @ wr.T + br + xd @ wo.T

    h_r = lin(x_real, params["emb_real_w"], params["emb_real_b"])
    h_v = lin(x_virtual, params["emb_virtual_w"], params["emb_virtual_b"])
    for lp in params["layers"]:
        u_r = gc(A_rr, h_r, h_r, *lp["r_to_r"]) + gc(A_vr, h_v, h_r, *lp["v_to_r"])
        u_v = gc(A_rv, h_r, h_v, *lp["r_to_v"])
        h_r = h_r + jnp.maximum(u_r, 0.0)
        h_v = h_v + jnp.maximum(u_v, 0.0)
    return {"node_embedding": h_r, "graph_embedding": P @ h_r}


# ---------------------------------------------------------------------------
# Deterministic synthetic graph, parameters, and run
# ---------------------------------------------------------------------------
def _mean_adj(src, dst, n_src, n_dst):
    a = np.zeros((n_dst, n_src), dtype=np.float32)
    for s, d in zip(src, dst):
        a[d, s] += 1.0
    deg = a.sum(axis=1, keepdims=True)
    deg = np.where(deg == 0.0, 1.0, deg)
    return a / deg


def _pad_to(n, q):
    return ((n + q - 1) // q) * q


if __name__ == "__main__":
    Nr, Nv, G, D = 16, 4, 2, 32     # real nodes, virtual nodes, graphs, emb_dim
    Fr, Fv = 24, 8                  # raw input feature dims per node type
    num_layers = 2

    batch_real = np.array([0] * 8 + [1] * 8, dtype=np.int32)

    # real<->real: bidirectional chain within each graph
    rr_src, rr_dst = [], []
    for i in range(Nr - 1):
        if batch_real[i] == batch_real[i + 1]:
            rr_src += [i, i + 1]
            rr_dst += [i + 1, i]
    # real -> virtual: each real node connects to one of its graph's 2 virtual nodes
    rv_src = list(range(Nr))
    rv_dst = [int(batch_real[i]) * 2 + (i % 2) for i in range(Nr)]
    # virtual -> real: reverse edges
    vr_src, vr_dst = rv_dst, rv_src

    A_rr_np = _mean_adj(rr_src, rr_dst, Nr, Nr)
    A_rv_np = _mean_adj(rv_src, rv_dst, Nr, Nv)   # (Nv, Nr)
    A_vr_np = _mean_adj(vr_src, vr_dst, Nv, Nr)   # (Nr, Nv)

    # mean pooling matrix over real nodes per graph
    P_np = np.zeros((G, Nr), dtype=np.float32)
    for g in range(G):
        idx = np.where(batch_real == g)[0]
        P_np[g, idx] = 1.0 / len(idx)

    key = jax.random.PRNGKey(0)

    def nrm(k, shape, scale=0.1):
        return scale * jax.random.normal(k, shape, dtype=jnp.float32)

    keys = iter(jax.random.split(key, 64))
    params = {
        "emb_real_w": nrm(next(keys), (D, Fr)),
        "emb_real_b": nrm(next(keys), (D,)),
        "emb_virtual_w": nrm(next(keys), (D, Fv)),
        "emb_virtual_b": nrm(next(keys), (D,)),
        "layers": [],
    }
    for _ in range(num_layers):
        lp = {}
        for edge in ("r_to_r", "r_to_v", "v_to_r"):
            w_rel = nrm(next(keys), (D, D))
            b_rel = nrm(next(keys), (D,))
            w_root = nrm(next(keys), (D, D))
            lp[edge] = (w_rel, b_rel, w_root)
        params["layers"].append(lp)

    x_real = nrm(next(keys), (Nr, Fr), scale=1.0)
    x_virtual = nrm(next(keys), (Nv, Fv), scale=1.0)

    # ---------------- one-time host-side padding / prep ----------------
    Nr_p = _pad_to(Nr, SUBLANE)
    Nv_p = _pad_to(Nv, SUBLANE)
    G_p = _pad_to(G, SUBLANE)

    xr_pad = jnp.asarray(_pad2(np.asarray(x_real), Nr_p, F_PAD))
    xv_pad = jnp.asarray(_pad2(np.asarray(x_virtual), Nv_p, F_PAD))
    a_rr = jnp.asarray(_pad2(A_rr_np, Nr_p, Nr_p))
    a_vr = jnp.asarray(_pad2(A_vr_np, Nr_p, Nv_p))
    a_rv = jnp.asarray(_pad2(A_rv_np, Nv_p, Nr_p))
    p_pad = jnp.asarray(_pad2(P_np, G_p, Nr_p))

    prep = prepare_params(params, D)

    # ---------------- run fused Pallas kernel ----------------
    out = virtual_gnn_forward(
        xr_pad, xv_pad,
        prep["ewr"], prep["ebr"], prep["ewv"], prep["ebv"],
        a_rr, a_vr, a_rv, p_pad,
        prep["wr"], prep["br"], prep["wv"], prep["bv"],
        n_real=Nr, n_graphs=G, emb_dim=D)
    out = jax.tree_util.tree_map(jax.block_until_ready, out)

    # ---------------- validate against pure-JAX reference ----------------
    ref = ref_forward(params, x_real, x_virtual,
                      jnp.asarray(A_rr_np), jnp.asarray(A_vr_np),
                      jnp.asarray(A_rv_np), jnp.asarray(P_np))
    assert out["node_embedding"].shape == (Nr, D)
    assert out["graph_embedding"].shape == (G, D)
    np.testing.assert_allclose(np.asarray(out["node_embedding"]),
                               np.asarray(ref["node_embedding"]),
                               atol=1e-4, rtol=1e-4)
    np.testing.assert_allclose(np.asarray(out["graph_embedding"]),
                               np.asarray(ref["graph_embedding"]),
                               atol=1e-4, rtol=1e-4)
    print("KERNEL_OK")
</pallas_src>

<mosaic_0001>
module attributes {stable_mosaic.version = 11 : i64} {
  func.func @_fused_vgnn_kernel(%arg0: i32, %arg1: memref<16x128xf32, #tpu.memory_space<vmem>>, %arg2: memref<8x128xf32, #tpu.memory_space<vmem>>, %arg3: memref<128x128xf32, #tpu.memory_space<vmem>>, %arg4: memref<1x128xf32, #tpu.memory_space<vmem>>, %arg5: memref<128x128xf32, #tpu.memory_space<vmem>>, %arg6: memref<1x128xf32, #tpu.memory_space<vmem>>, %arg7: memref<16x16xf32, #tpu.memory_space<vmem>>, %arg8: memref<16x8xf32, #tpu.memory_space<vmem>>, %arg9: memref<8x16xf32, #tpu.memory_space<vmem>>, %arg10: memref<8x16xf32, #tpu.memory_space<vmem>>, %arg11: memref<2x384x128xf32, #tpu.memory_space<vmem>>, %arg12: memref<2x1x128xf32, #tpu.memory_space<vmem>>, %arg13: memref<2x256x128xf32, #tpu.memory_space<vmem>>, %arg14: memref<2x1x128xf32, #tpu.memory_space<vmem>>, %arg15: memref<16x128xf32, #tpu.memory_space<vmem>>, %arg16: memref<8x128xf32, #tpu.memory_space<vmem>>) attributes {dimension_semantics = [#tpu.dimension_semantics<arbitrary>], iteration_bounds = array<i64: 1>, scalar_prefetch = 0 : i64, scratch_operands = 0 : i64, tpu.core_type = #tpu.core_type<tc>, window_params = [{pipeline_mode = #tpu.pipeline_mode<synchronous>, transform_indices = @transform_0, window_bounds = array<i64: 16, 128>}, {pipeline_mode = #tpu.pipeline_mode<synchronous>, transform_indices = @transform_1, window_bounds = array<i64: 8, 128>}, {pipeline_mode = #tpu.pipeline_mode<synchronous>, transform_indices = @transform_2, window_bounds = array<i64: 128, 128>}, {pipeline_mode = #tpu.pipeline_mode<synchronous>, transform_indices = @transform_3, window_bounds = array<i64: 1, 128>}, {pipeline_mode = #tpu.pipeline_mode<synchronous>, transform_indices = @transform_4, window_bounds = array<i64: 128, 128>}, {pipeline_mode = #tpu.pipeline_mode<synchronous>, transform_indices = @transform_5, window_bounds = array<i64: 1, 128>}, {pipeline_mode = #tpu.pipeline_mode<synchronous>, transform_indices = @transform_6, window_bounds = array<i64: 16, 16>}, {pipeline_mode = #tpu.pipeline_mode<synchronous>, transform_indices = @transform_7, window_bounds = array<i64: 16, 8>}, {pipeline_mode = #tpu.pipeline_mode<synchronous>, transform_indices = @transform_8, window_bounds = array<i64: 8, 16>}, {pipeline_mode = #tpu.pipeline_mode<synchronous>, transform_indices = @transform_9, window_bounds = array<i64: 8, 16>}, {pipeline_mode = #tpu.pipeline_mode<synchronous>, transform_indices = @transform_10, window_bounds = array<i64: 2, 384, 128>}, {pipeline_mode = #tpu.pipeline_mode<synchronous>, transform_indices = @transform_11, window_bounds = array<i64: 2, 1, 128>}, {pipeline_mode = #tpu.pipeline_mode<synchronous>, transform_indices = @transform_12, window_bounds = array<i64: 2, 256, 128>}, {pipeline_mode = #tpu.pipeline_mode<synchronous>, transform_indices = @transform_13, window_bounds = array<i64: 2, 1, 128>}, {pipeline_mode = #tpu.pipeline_mode<synchronous>, transform_indices = @transform_14, window_bounds = array<i64: 16, 128>}, {pipeline_mode = #tpu.pipeline_mode<synchronous>, transform_indices = @transform_15, window_bounds = array<i64: 8, 128>}]} {
    %c0 = arith.constant 0 : index
    %c0_0 = arith.constant 0 : index
    %0 = vector.load %arg1[%c0, %c0_0] : memref<16x128xf32, #tpu.memory_space<vmem>>, vector<16x128xf32>
    %c0_1 = arith.constant 0 : index
    %c0_2 = arith.constant 0 : index
    %1 = vector.load %arg3[%c0_1, %c0_2] : memref<128x128xf32, #tpu.memory_space<vmem>>, vector<128x128xf32>
    %cst = arith.constant dense<0.000000e+00> : vector<16x128xf32>
    %2 = tpu.matmul %0, %1, %cst {dimension_numbers = #tpu.dot_dimension_numbers<[1], [0], [0], [1], [0, 0, 1, 1], [], []>} : vector<16x128xf32>, vector<128x128xf32>, vector<16x128xf32> -> vector<16x128xf32>
    %c0_3 = arith.constant 0 : index
    %c0_4 = arith.constant 0 : index
    %3 = vector.load %arg4[%c0_3, %c0_4] : memref<1x128xf32, #tpu.memory_space<vmem>>, vector<1x128xf32>
    %4 = vector.broadcast %3 : vector<1x128xf32> to vector<16x128xf32>
    %5 = arith.addf %2, %4 : vector<16x128xf32>
    %c0_5 = arith.constant 0 : index
    %c0_6 = arith.constant 0 : index
    %6 = vector.load %arg2[%c0_5, %c0_6] : memref<8x128xf32, #tpu.memory_space<vmem>>, vector<8x128xf32>
    %c0_7 = arith.constant 0 : index
    %c0_8 = arith.constant 0 : index
    %7 = vector.load %arg5[%c0_7, %c0_8] : memref<128x128xf32, #tpu.memory_space<vmem>>, vector<128x128xf32>
    %cst_9 = arith.constant dense<0.000000e+00> : vector<8x128xf32>
    %8 = tpu.matmul %6, %7, %cst_9 {dimension_numbers = #tpu.dot_dimension_numbers<[1], [0], [0], [1], [0, 0, 1, 1], [], []>} : vector<8x128xf32>, vector<128x128xf32>, vector<8x128xf32> -> vector<8x128xf32>
    %c0_10 = arith.constant 0 : index
    %c0_11 = arith.constant 0 : index
    %9 = vector.load %arg6[%c0_10, %c0_11] : memref<1x128xf32, #tpu.memory_space<vmem>>, vector<1x128xf32>
    %10 = vector.broadcast %9 : vector<1x128xf32> to vector<8x128xf32>
    %11 = arith.addf %8, %10 : vector<8x128xf32>
    %c0_12 = arith.constant 0 : index
    %c0_13 = arith.constant 0 : index
    %12 = vector.load %arg7[%c0_12, %c0_13] : memref<16x16xf32, #tpu.memory_space<vmem>>, vector<16x16xf32>
    %c0_14 = arith.constant 0 : index
    %c0_15 = arith.constant 0 : index
    %13 = vector.load %arg8[%c0_14, %c0_15] : memref<16x8xf32, #tpu.memory_space<vmem>>, vector<16x8xf32>
    %c0_16 = arith.constant 0 : index
    %c0_17 = arith.constant 0 : index
    %14 = vector.load %arg9[%c0_16, %c0_17] : memref<8x16xf32, #tpu.memory_space<vmem>>, vector<8x16xf32>
    %cst_18 = arith.constant dense<0.000000e+00> : vector<16x128xf32>
    %15 = tpu.matmul %12, %5, %cst_18 {dimension_numbers = #tpu.dot_dimension_numbers<[1], [0], [0], [1], [0, 0, 1, 1], [], []>} : vector<16x16xf32>, vector<16x128xf32>, vector<16x128xf32> -> vector<16x128xf32>
    %cst_19 = arith.constant dense<0.000000e+00> : vector<16x128xf32>
    %16 = tpu.matmul %13, %11, %cst_19 {dimension_numbers = #tpu.dot_dimension_numbers<[1], [0], [0], [1], [0, 0, 1, 1], [], []>} : vector<16x8xf32>, vector<8x128xf32>, vector<16x128xf32> -> vector<16x128xf32>
    %cst_20 = arith.constant dense<0.000000e+00> : vector<8x128xf32>
    %17 = tpu.matmul %14, %5, %cst_20 {dimension_numbers = #tpu.dot_dimension_numbers<[1], [0], [0], [1], [0, 0, 1, 1], [], []>} : vector<8x16xf32>, vector<16x128xf32>, vector<8x128xf32> -> vector<8x128xf32>
    %18 = tpu.concatenate %15, %16, %5 in 1 : vector<16x128xf32>, vector<16x128xf32>, vector<16x128xf32> -> vector<16x384xf32>
    %19 = tpu.concatenate %17, %11 in 1 : vector<8x128xf32>, vector<8x128xf32> -> vector<8x256xf32>
    %c0_21 = arith.constant 0 : index
    %c0_22 = arith.constant 0 : index
    %c0_23 = arith.constant 0 : index
    %20 = vector.load %arg11[%c0_21, %c0_22, %c0_23] : memref<2x384x128xf32, #tpu.memory_space<vmem>>, vector<1x384x128xf32>
    %21 = vector.shape_cast %20 : vector<1x384x128xf32> to vector<384x128xf32>
    %cst_24 = arith.constant dense<0.000000e+00> : vector<16x128xf32>
    %22 = tpu.matmul %18, %21, %cst_24 {dimension_numbers = #tpu.dot_dimension_numbers<[1], [0], [0], [1], [0, 0, 1, 1], [], []>} : vector<16x384xf32>, vector<384x128xf32>, vector<16x128xf32> -> vector<16x128xf32>
    %c0_25 = arith.constant 0 : index
    %c0_26 = arith.constant 0 : index
    %c0_27 = arith.constant 0 : index
    %23 = vector.load %arg12[%c0_25, %c0_26, %c0_27] : memref<2x1x128xf32, #tpu.memory_space<vmem>>, vector<1x1x128xf32>
    %24 = vector.shape_cast %23 : vector<1x1x128xf32> to vector<1x128xf32>
    %25 = vector.broadcast %24 : vector<1x128xf32> to vector<16x128xf32>
    %26 = arith.addf %22, %25 : vector<16x128xf32>
    %c0_28 = arith.constant 0 : index
    %c0_29 = arith.constant 0 : index
    %c0_30 = arith.constant 0 : index
    %27 = vector.load %arg13[%c0_28, %c0_29, %c0_30] : memref<2x256x128xf32, #tpu.memory_space<vmem>>, vector<1x256x128xf32>
    %28 = vector.shape_cast %27 : vector<1x256x128xf32> to vector<256x128xf32>
    %cst_31 = arith.constant dense<0.000000e+00> : vector<8x128xf32>
    %29 = tpu.matmul %19, %28, %cst_31 {dimension_numbers = #tpu.dot_dimension_numbers<[1], [0], [0], [1], [0, 0, 1, 1], [], []>} : vector<8x256xf32>, vector<256x128xf32>, vector<8x128xf32> -> vector<8x128xf32>
    %c0_32 = arith.constant 0 : index
    %c0_33 = arith.constant 0 : index
    %c0_34 = arith.constant 0 : index
    %30 = vector.load %arg14[%c0_32, %c0_33, %c0_34] : memref<2x1x128xf32, #tpu.memory_space<vmem>>, vector<1x1x128xf32>
    %31 = vector.shape_cast %30 : vector<1x1x128xf32> to vector<1x128xf32>
    %32 = vector.broadcast %31 : vector<1x128xf32> to vector<8x128xf32>
    %33 = arith.addf %29, %32 : vector<8x128xf32>
    %cst_35 = arith.constant 0.000000e+00 : f32
    %34 = vector.broadcast %cst_35 : f32 to vector<16x128xf32>
    %35 = arith.maximumf %26, %34 : vector<16x128xf32>
    %36 = arith.addf %5, %35 : vector<16x128xf32>
    %cst_36 = arith.constant 0.000000e+00 : f32
    %37 = vector.broadcast %cst_36 : f32 to vector<8x128xf32>
    %38 = arith.maximumf %33, %37 : vector<8x128xf32>
    %39 = arith.addf %11, %38 : vector<8x128xf32>
    %cst_37 = arith.constant dense<0.000000e+00> : vector<16x128xf32>
    %40 = tpu.matmul %12, %36, %cst_37 {dimension_numbers = #tpu.dot_dimension_numbers<[1], [0], [0], [1], [0, 0, 1, 1], [], []>} : vector<16x16xf32>, vector<16x128xf32>, vector<16x128xf32> -> vector<16x128xf32>
    %cst_38 = arith.constant dense<0.000000e+00> : vector<16x128xf32>
    %41 = tpu.matmul %13, %39, %cst_38 {dimension_numbers = #tpu.dot_dimension_numbers<[1], [0], [0], [1], [0, 0, 1, 1], [], []>} : vector<16x8xf32>, vector<8x128xf32>, vector<16x128xf32> -> vector<16x128xf32>
    %42 = tpu.concatenate %40, %41, %36 in 1 : vector<16x128xf32>, vector<16x128xf32>, vector<16x128xf32> -> vector<16x384xf32>
    %c1 = arith.constant 1 : index
    %c0_39 = arith.constant 0 : index
    %c0_40 = arith.constant 0 : index
    %43 = vector.load %arg11[%c1, %c0_39, %c0_40] : memref<2x384x128xf32, #tpu.memory_space<vmem>>, vector<1x384x128xf32>
    %44 = vector.shape_cast %43 : vector<1x384x128xf32> to vector<384x128xf32>
    %cst_41 = arith.constant dense<0.000000e+00> : vector<16x128xf32>
    %45 = tpu.matmul %42, %44, %cst_41 {dimension_numbers = #tpu.dot_dimension_numbers<[1], [0], [0], [1], [0, 0, 1, 1], [], []>} : vector<16x384xf32>, vector<384x128xf32>, vector<16x128xf32> -> vector<16x128xf32>
    %c1_42 = arith.constant 1 : index
    %c0_43 = arith.constant 0 : index
    %c0_44 = arith.constant 0 : index
    %46 = vector.load %arg12[%c1_42, %c0_43, %c0_44] : memref<2x1x128xf32, #tpu.memory_space<vmem>>, vector<1x1x128xf32>
    %47 = vector.shape_cast %46 : vector<1x1x128xf32> to vector<1x128xf32>
    %48 = vector.broadcast %47 : vector<1x128xf32> to vector<16x128xf32>
    %49 = arith.addf %45, %48 : vector<16x128xf32>
    %cst_45 = arith.constant 0.000000e+00 : f32
    %50 = vector.broadcast %cst_45 : f32 to vector<16x128xf32>
    %51 = arith.maximumf %49, %50 : vector<16x128xf32>
    %52 = arith.addf %36, %51 : vector<16x128xf32>
    %c0_46 = arith.constant 0 : index
    %c0_47 = arith.constant 0 : index
    %53 = vector.load %arg15[%c0_46, %c0_47] : memref<16x128xf32, #tpu.memory_space<vmem>>, vector<16x128xf32>
    tpu.vector_store %arg15[%c0_46, %c0_47], %52 {strides = array<i32>} : memref<16x128xf32, #tpu.memory_space<vmem>>, vector<16x128xf32>,
    %c0_48 = arith.constant 0 : index
    %c0_49 = arith.constant 0 : index
    %54 = vector.load %arg10[%c0_48, %c0_49] : memref<8x16xf32, #tpu.memory_space<vmem>>, vector<8x16xf32>
    %cst_50 = arith.constant dense<0.000000e+00> : vector<8x128xf32>
    %55 = tpu.matmul %54, %52, %cst_50 {dimension_numbers = #tpu.dot_dimension_numbers<[1], [0], [0], [1], [0, 0, 1, 1], [], []>} : vector<8x16xf32>, vector<16x128xf32>, vector<8x128xf32> -> vector<8x128xf32>
    %c0_51 = arith.constant 0 : index
    %c0_52 = arith.constant 0 : index
    %56 = vector.load %arg16[%c0_51, %c0_52] : memref<8x128xf32, #tpu.memory_space<vmem>>, vector<8x128xf32>
    tpu.vector_store %arg16[%c0_51, %c0_52], %55 {strides = array<i32>} : memref<8x128xf32, #tpu.memory_space<vmem>>, vector<8x128xf32>,
    return
  }
  func.func @transform_0(%arg0: i32) -> (i32, i32) {
    %c0_i32 = arith.constant 0 : i32
    %c0_i32_0 = arith.constant 0 : i32
    %c0_i32_1 = arith.constant 0 : i32
    return %c0_i32, %c0_i32_0 : i32, i32
  }
  func.func @transform_1(%arg0: i32) -> (i32, i32) {
    %c0_i32 = arith.constant 0 : i32
    %c0_i32_0 = arith.constant 0 : i32
    %c0_i32_1 = arith.constant 0 : i32
    return %c0_i32, %c0_i32_0 : i32, i32
  }
  func.func @transform_2(%arg0: i32) -> (i32, i32) {
    %c0_i32 = arith.constant 0 : i32
    %c0_i32_0 = arith.constant 0 : i32
    %c0_i32_1 = arith.constant 0 : i32
    return %c0_i32, %c0_i32_0 : i32, i32
  }
  func.func @transform_3(%arg0: i32) -> (i32, i32) {
    %c0_i32 = arith.constant 0 : i32
    %c0_i32_0 = arith.constant 0 : i32
    %c0_i32_1 = arith.constant 0 : i32
    return %c0_i32, %c0_i32_0 : i32, i32
  }
  func.func @transform_4(%arg0: i32) -> (i32, i32) {
    %c0_i32 = arith.constant 0 : i32
    %c0_i32_0 = arith.constant 0 : i32
    %c0_i32_1 = arith.constant 0 : i32
    return %c0_i32, %c0_i32_0 : i32, i32
  }
  func.func @transform_5(%arg0: i32) -> (i32, i32) {
    %c0_i32 = arith.constant 0 : i32
    %c0_i32_0 = arith.constant 0 : i32
    %c0_i32_1 = arith.constant 0 : i32
    return %c0_i32, %c0_i32_0 : i32, i32
  }
  func.func @transform_6(%arg0: i32) -> (i32, i32) {
    %c0_i32 = arith.constant 0 : i32
    %c0_i32_0 = arith.constant 0 : i32
    %c0_i32_1 = arith.constant 0 : i32
    return %c0_i32, %c0_i32_0 : i32, i32
  }
  func.func @transform_7(%arg0: i32) -> (i32, i32) {
    %c0_i32 = arith.constant 0 : i32
    %c0_i32_0 = arith.constant 0 : i32
    %c0_i32_1 = arith.constant 0 : i32
    return %c0_i32, %c0_i32_0 : i32, i32
  }
  func.func @transform_8(%arg0: i32) -> (i32, i32) {
    %c0_i32 = arith.constant 0 : i32
    %c0_i32_0 = arith.constant 0 : i32
    %c0_i32_1 = arith.constant 0 : i32
    return %c0_i32, %c0_i32_0 : i32, i32
  }
  func.func @transform_9(%arg0: i32) -> (i32, i32) {
    %c0_i32 = arith.constant 0 : i32
    %c0_i32_0 = arith.constant 0 : i32
    %c0_i32_1 = arith.constant 0 : i32
    return %c0_i32, %c0_i32_0 : i32, i32
  }
  func.func @transform_10(%arg0: i32) -> (i32, i32, i32) {
    %c0_i32 = arith.constant 0 : i32
    %c0_i32_0 = arith.constant 0 : i32
    %c0_i32_1 = arith.constant 0 : i32
    %c0_i32_2 = arith.constant 0 : i32
    return %c0_i32, %c0_i32_0, %c0_i32_1 : i32, i32, i32
  }
  func.func @transform_11(%arg0: i32) -> (i32, i32, i32) {
    %c0_i32 = arith.constant 0 : i32
    %c0_i32_0 = arith.constant 0 : i32
    %c0_i32_1 = arith.constant 0 : i32
    %c0_i32_2 = arith.constant 0 : i32
    return %c0_i32, %c0_i32_0, %c0_i32_1 : i32, i32, i32
  }
  func.func @transform_12(%arg0: i32) -> (i32, i32, i32) {
    %c0_i32 = arith.constant 0 : i32
    %c0_i32_0 = arith.constant 0 : i32
    %c0_i32_1 = arith.constant 0 : i32
    %c0_i32_2 = arith.constant 0 : i32
    return %c0_i32, %c0_i32_0, %c0_i32_1 : i32, i32, i32
  }
  func.func @transform_13(%arg0: i32) -> (i32, i32, i32) {
    %c0_i32 = arith.constant 0 : i32
    %c0_i32_0 = arith.constant 0 : i32
    %c0_i32_1 = arith.constant 0 : i32
    %c0_i32_2 = arith.constant 0 : i32
    return %c0_i32, %c0_i32_0, %c0_i32_1 : i32, i32, i32
  }
  func.func @transform_14(%arg0: i32) -> (i32, i32) {
    %c0_i32 = arith.constant 0 : i32
    %c0_i32_0 = arith.constant 0 : i32
    %c0_i32_1 = arith.constant 0 : i32
    return %c0_i32, %c0_i32_0 : i32, i32
  }
  func.func @transform_15(%arg0: i32) -> (i32, i32) {
    %c0_i32 = arith.constant 0 : i32
    %c0_i32_0 = arith.constant 0 : i32
    %c0_i32_1 = arith.constant 0 : i32
    return %c0_i32, %c0_i32_0 : i32, i32
  }
}

</mosaic_0001>

<llo_original>
// kernel: virtual_gnn_forward.1
$region0: #{virtual_gnn_forward.1}
  #allocation0 [shape = 'u32[]', space=smem, size = 0x4, offset = 0x4, fixed_abs, tag = 'smem constant byte address 0x4 - core index']
  #allocation1 [shape = 'u32[144,128]{1,0:T(1,128)}', space=vmem, size = 0x12000, scoped, tag = 'internal scratch']
  %s0 = inlined_call_operand.vmem [shape: f32[16,128], index: 0, kind: input, shape index: {}]
  %s1 = inlined_call_operand.hbm [shape: f32[8,128], index: 1, kind: input, shape index: {}]
  %s2 = inlined_call_operand.hbm [shape: f32[128,128], index: 2, kind: input, shape index: {}]
  %s3 = inlined_call_operand.hbm [shape: f32[1,128], index: 3, kind: input, shape index: {}]
  %s4 = inlined_call_operand.hbm [shape: f32[128,128], index: 4, kind: input, shape index: {}]
  %s5 = inlined_call_operand.hbm [shape: f32[1,128], index: 5, kind: input, shape index: {}]
  %s6 = inlined_call_operand.vmem [shape: f32[16,16], index: 6, kind: input, shape index: {}]
  %s7 = inlined_call_operand.vmem [shape: f32[16,8], index: 7, kind: input, shape index: {}]
  %s8 = inlined_call_operand.hbm [shape: f32[8,16], index: 8, kind: input, shape index: {}]
  %s9 = inlined_call_operand.vmem [shape: f32[8,16], index: 9, kind: input, shape index: {}]
  %s10 = inlined_call_operand.hbm [shape: f32[2,384,128], index: 10, kind: input, shape index: {}]
  %s11 = inlined_call_operand.vmem [shape: f32[2,1,128], index: 11, kind: input, shape index: {}]
  %s12 = inlined_call_operand.hbm [shape: f32[2,256,128], index: 12, kind: input, shape index: {}]
  %s13 = inlined_call_operand.vmem [shape: f32[2,1,128], index: 13, kind: input, shape index: {}]
  %s14 = inlined_call_operand.hbm [shape: f32[16,128], index: 14, kind: output, shape index: {0}]
  %s15 = inlined_call_operand.vmem [shape: f32[8,128], index: 15, kind: output, shape index: {1}]
  %16 = xla_tuple %s14, %s15
  %s17 = sld [smem:[#allocation0]]
  $region106: #{virtual_gnn_forward.1} parent=0
    _
  %s19 = ssub.s32 1, %s17
  %s20 = scalar_select 0, %s19, %s17
  $region1: #{virtual_gnn_forward.1} parent=0
    #allocation2 [shape = 'u8[4096]{0}', space=vmem, size = 0x1000, scoped, tag = 'input window, operand 1, single buffered']
    #allocation3 [shape = 's32[1]{0}', space=sflag, size = 0x4, scoped, tag = 'scoped memory for virtual_gnn_forward.1']
    #allocation4 [shape = 's32[1]{0}', space=sflag, size = 0x4, scoped, tag = 'scoped memory for virtual_gnn_forward.1']
    #allocation5 [shape = 'u8[65536]{0}', space=vmem, size = 0x10000, scoped, tag = 'input window, operand 2, single buffered']
    #allocation6 [shape = 's32[1]{0}', space=sflag, size = 0x4, scoped, tag = 'scoped memory for virtual_gnn_forward.1']
    #allocation7 [shape = 'u8[512]{0}', space=vmem, size = 0x400, scoped, tag = 'input window, operand 3, single buffered']
    #allocation8 [shape = 'u8[65536]{0}', space=vmem, size = 0x10000, scoped, tag = 'input window, operand 4, single buffered']
    #allocation9 [shape = 's32[1]{0}', space=sflag, size = 0x4, scoped, tag = 'scoped memory for virtual_gnn_forward.1']
    #allocation10 [shape = 'u8[512]{0}', space=vmem, size = 0x400, scoped, tag = 'input window, operand 5, single buffered']
    #allocation11 [shape = 'u8[4096]{0}', space=vmem, size = 0x1000, scoped, tag = 'input window, operand 8, single buffered']
    #allocation12 [shape = 's32[1]{0}', space=sflag, size = 0x4, scoped, tag = 'scoped memory for virtual_gnn_forward.1']
    #allocation13 [shape = 'u8[393216]{0}', space=vmem, size = 0x60000, scoped, tag = 'input window, operand 10, single buffered']
    #allocation14 [shape = 'u8[262144]{0}', space=vmem, size = 0x40000, scoped, tag = 'input window, operand 12, single buffered']
    #allocation15 [shape = 's32[1]{0}', space=sflag, size = 0x4, scoped, tag = 'scoped memory for virtual_gnn_forward.1']
    #allocation16 [shape = 'u8[8192]{0}', space=vmem, size = 0x2000, scoped, tag = 'output window, operand 0, single buffered']
    %21 = vsyncpa [#allocation3], 0
    %22 = vsyncpa [#allocation6], 0
    %23 = vsyncpa [#allocation9], 0
    %24 = vsyncpa [#allocation12], 0
    %25 = vsyncpa [#allocation15], 0
    %26 = vsyncpa [#allocation4], 0
    // Predicated region
    $region2: #{virtual_gnn_forward.1} parent=1 // pred_check
      _
    $region3: #{virtual_gnn_forward.1} parent=1 // pred_check_branch
      %28 = sbr.rel (0) target = $region5
    $region4: #{virtual_gnn_forward.1} parent=1 // pred_region
      _
    $region5: #{virtual_gnn_forward.1} parent=1 // pred_fallthru
      _
    // Predicated region
    $region6: #{virtual_gnn_forward.1} parent=1 // pred_check
      _
    $region7: #{virtual_gnn_forward.1} parent=1 // pred_check_branch
      %30 = sbr.rel (0) target = $region9
    $region8: #{virtual_gnn_forward.1} parent=1 // pred_region
      %s32 = ssub.s32 128, 128
      %33 = vsyncadd [#allocation3], %s32
      %s35 = sshll.u32 [#allocation2], 4
      %s36 = int_to_ptr.vmem [resolvable:$true] %s35
      %38 = dma.hbm_to_vmem [thread:$0]  %s1, 128, %s36, [#allocation3]
    $region9: #{virtual_gnn_forward.1} parent=1 // pred_fallthru
      _
    // Predicated region
    $region10: #{virtual_gnn_forward.1} parent=1 // pred_check
      _
    $region11: #{virtual_gnn_forward.1} parent=1 // pred_check_branch
      %40 = sbr.rel (0) target = $region13
    $region12: #{virtual_gnn_forward.1} parent=1 // pred_region
      %s42 = ssub.s32 2048, 2048
      %43 = vsyncadd [#allocation6], %s42
      %s44 = sshll.u32 [#allocation5], 4
      %s45 = int_to_ptr.vmem [resolvable:$true] %s44
      %50 = dma.hbm_to_vmem [thread:$0]  %s2, 2048, %s45, [#allocation6], 128, 128, 8
    $region13: #{virtual_gnn_forward.1} parent=1 // pred_fallthru
      _
    // Predicated region
    $region14: #{virtual_gnn_forward.1} parent=1 // pred_check
      _
    $region15: #{virtual_gnn_forward.1} parent=1 // pred_check_branch
      %52 = sbr.rel (0) target = $region17
    $region16: #{virtual_gnn_forward.1} parent=1 // pred_region
      %s54 = ssub.s32 16, 16
      %55 = vsyncadd [#allocation6], %s54
      %s57 = sshll.u32 [#allocation7], 4
      %s58 = int_to_ptr.vmem [resolvable:$true] %s57
      %60 = dma.hbm_to_vmem [thread:$0]  %s3, 16, %s58, [#allocation6]
    $region17: #{virtual_gnn_forward.1} parent=1 // pred_fallthru
      _
    // Predicated region
    $region18: #{virtual_gnn_forward.1} parent=1 // pred_check
      _
    $region19: #{virtual_gnn_forward.1} parent=1 // pred_check_branch
      %62 = sbr.rel (0) target = $region21
    $region20: #{virtual_gnn_forward.1} parent=1 // pred_region
      %s64 = ssub.s32 2048, 2048
      %65 = vsyncadd [#allocation9], %s64
      %s66 = sshll.u32 [#allocation8], 4
      %s67 = int_to_ptr.vmem [resolvable:$true] %s66
      %72 = dma.hbm_to_vmem [thread:$0]  %s4, 2048, %s67, [#allocation9], 128, 128, 8
    $region21: #{virtual_gnn_forward.1} parent=1 // pred_fallthru
      _
    // Predicated region
    $region22: #{virtual_gnn_forward.1} parent=1 // pred_check
      _
    $region23: #{virtual_gnn_forward.1} parent=1 // pred_check_branch
      %74 = sbr.rel (0) target = $region25
    $region24: #{virtual_gnn_forward.1} parent=1 // pred_region
      %s76 = ssub.s32 16, 16
      %77 = vsyncadd [#allocation9], %s76
      %s79 = sshll.u32 [#allocation10], 4
      %s80 = int_to_ptr.vmem [resolvable:$true] %s79
      %82 = dma.hbm_to_vmem [thread:$0]  %s5, 16, %s80, [#allocation9]
    $region25: #{virtual_gnn_forward.1} parent=1 // pred_fallthru
      _
    // Predicated region
    $region26: #{virtual_gnn_forward.1} parent=1 // pred_check
      _
    $region27: #{virtual_gnn_forward.1} parent=1 // pred_check_branch
      %84 = sbr.rel (0) target = $region29
    $region28: #{virtual_gnn_forward.1} parent=1 // pred_region
      _
    $region29: #{virtual_gnn_forward.1} parent=1 // pred_fallthru
      _
    // Predicated region
    $region30: #{virtual_gnn_forward.1} parent=1 // pred_check
      _
    $region31: #{virtual_gnn_forward.1} parent=1 // pred_check_branch
      %86 = sbr.rel (0) target = $region33
    $region32: #{virtual_gnn_forward.1} parent=1 // pred_region
      _
    $region33: #{virtual_gnn_forward.1} parent=1 // pred_fallthru
      _
    // Predicated region
    $region34: #{virtual_gnn_forward.1} parent=1 // pred_check
      _
    $region35: #{virtual_gnn_forward.1} parent=1 // pred_check_branch
      %88 = sbr.rel (0) target = $region37
    $region36: #{virtual_gnn_forward.1} parent=1 // pred_region
      %s90 = ssub.s32 128, 128
      %91 = vsyncadd [#allocation12], %s90
      %s93 = sshll.u32 [#allocation11], 4
      %s94 = int_to_ptr.vmem [resolvable:$true] %s93
      %96 = dma.hbm_to_vmem [thread:$0]  %s8, 128, %s94, [#allocation12]
    $region37: #{virtual_gnn_forward.1} parent=1 // pred_fallthru
      _
    // Predicated region
    $region38: #{virtual_gnn_forward.1} parent=1 // pred_check
      _
    $region39: #{virtual_gnn_forward.1} parent=1 // pred_check_branch
      %98 = sbr.rel (0) target = $region41
    $region40: #{virtual_gnn_forward.1} parent=1 // pred_region
      _
    $region41: #{virtual_gnn_forward.1} parent=1 // pred_fallthru
      _
    // Predicated region
    $region42: #{virtual_gnn_forward.1} parent=1 // pred_check
      _
    $region43: #{virtual_gnn_forward.1} parent=1 // pred_check_branch
      %100 = sbr.rel (0) target = $region45
    $region44: #{virtual_gnn_forward.1} parent=1 // pred_region
      %s102 = ssub.s32 12288, 12288
      %103 = vsyncadd [#allocation12], %s102
      %s104 = sshll.u32 [#allocation13], 4
      %s105 = int_to_ptr.vmem [resolvable:$true] %s104
      %110 = dma.hbm_to_vmem [thread:$0]  %s10, 12288, %s105, [#allocation12], 128, 128, 8
    $region45: #{virtual_gnn_forward.1} parent=1 // pred_fallthru
      _
    // Predicated region
    $region46: #{virtual_gnn_forward.1} parent=1 // pred_check
      _
    $region47: #{virtual_gnn_forward.1} parent=1 // pred_check_branch
      %112 = sbr.rel (0) target = $region49
    $region48: #{virtual_gnn_forward.1} parent=1 // pred_region
      _
    $region49: #{virtual_gnn_forward.1} parent=1 // pred_fallthru
      _
    // Predicated region
    $region50: #{virtual_gnn_forward.1} parent=1 // pred_check
      _
    $region51: #{virtual_gnn_forward.1} parent=1 // pred_check_branch
      %114 = sbr.rel (0) target = $region53
    $region52: #{virtual_gnn_forward.1} parent=1 // pred_region
      %s116 = ssub.s32 8192, 8192
      %117 = vsyncadd [#allocation15], %s116
      %s118 = sshll.u32 [#allocation14], 4
      %s119 = int_to_ptr.vmem [resolvable:$true] %s118
      %124 = dma.hbm_to_vmem [thread:$0]  %s12, 8192, %s119, [#allocation15], 128, 128, 8
    $region53: #{virtual_gnn_forward.1} parent=1 // pred_fallthru
      _
    // Predicated region
    $region54: #{virtual_gnn_forward.1} parent=1 // pred_check
      _
    $region55: #{virtual_gnn_forward.1} parent=1 // pred_check_branch
      %126 = sbr.rel (0) target = $region57
    $region56: #{virtual_gnn_forward.1} parent=1 // pred_region
      _
    $region57: #{virtual_gnn_forward.1} parent=1 // pred_fallthru
      _
    // Predicated region
    $region58: #{virtual_gnn_forward.1} parent=1 // pred_check
      _
    $region59: #{virtual_gnn_forward.1} parent=1 // pred_check_branch
      %128 = sbr.rel (0) target = $region61
    $region60: #{virtual_gnn_forward.1} parent=1 // pred_region
      %129 = dma.done [#allocation3], 128
    $region61: #{virtual_gnn_forward.1} parent=1 // pred_fallthru
      _
    // Predicated region
    $region62: #{virtual_gnn_forward.1} parent=1 // pred_check
      _
    $region63: #{virtual_gnn_forward.1} parent=1 // pred_check_branch
      %131 = sbr.rel (0) target = $region65
    $region64: #{virtual_gnn_forward.1} parent=1 // pred_region
      %132 = dma.done [#allocation6], 2048
    $region65: #{virtual_gnn_forward.1} parent=1 // pred_fallthru
      _
    // Predicated region
    $region66: #{virtual_gnn_forward.1} parent=1 // pred_check
      _
    $region67: #{virtual_gnn_forward.1} parent=1 // pred_check_branch
      %134 = sbr.rel (0) target = $region69
    $region68: #{virtual_gnn_forward.1} parent=1 // pred_region
      %135 = dma.done [#allocation6], 16
    $region69: #{virtual_gnn_forward.1} parent=1 // pred_fallthru
      _
    // Predicated region
    $region70: #{virtual_gnn_forward.1} parent=1 // pred_check
      _
    $region71: #{virtual_gnn_forward.1} parent=1 // pred_check_branch
      %137 = sbr.rel (0) target = $region73
    $region72: #{virtual_gnn_forward.1} parent=1 // pred_region
      %138 = dma.done [#allocation9], 2048
    $region73: #{virtual_gnn_forward.1} parent=1 // pred_fallthru
      _
    // Predicated region
    $region74: #{virtual_gnn_forward.1} parent=1 // pred_check
      _
    $region75: #{virtual_gnn_forward.1} parent=1 // pred_check_branch
      %140 = sbr.rel (0) target = $region77
    $region76: #{virtual_gnn_forward.1} parent=1 // pred_region
      %141 = dma.done [#allocation9], 16
    $region77: #{virtual_gnn_forward.1} parent=1 // pred_fallthru
      _
    // Predicated region
    $region78: #{virtual_gnn_forward.1} parent=1 // pred_check
      _
    $region79: #{virtual_gnn_forward.1} parent=1 // pred_check_branch
      %143 = sbr.rel (0) target = $region81
    $region80: #{virtual_gnn_forward.1} parent=1 // pred_region
      %144 = dma.done [#allocation12], 128
    $region81: #{virtual_gnn_forward.1} parent=1 // pred_fallthru
      _
    // Predicated region
    $region82: #{virtual_gnn_forward.1} parent=1 // pred_check
      _
    $region83: #{virtual_gnn_forward.1} parent=1 // pred_check_branch
      %146 = sbr.rel (0) target = $region85
    $region84: #{virtual_gnn_forward.1} parent=1 // pred_region
      %147 = dma.done [#allocation12], 12288
    $region85: #{virtual_gnn_forward.1} parent=1 // pred_fallthru
      _
    // Predicated region
    $region86: #{virtual_gnn_forward.1} parent=1 // pred_check
      _
    $region87: #{virtual_gnn_forward.1} parent=1 // pred_check_branch
      %149 = sbr.rel (0) target = $region89
    $region88: #{virtual_gnn_forward.1} parent=1 // pred_region
      %150 = dma.done [#allocation15], 8192
    $region89: #{virtual_gnn_forward.1} parent=1 // pred_fallthru
      _
    %v151 = vld [vmem:[%s0] sm:$0xff]
    %v152 = vld [vmem:[%s0 + $0x8] sm:$0xff]
    %v153 = vld [vmem:[#allocation5] sm:$0xff]
    %v154 = vld [vmem:[#allocation5 + $0x8] sm:$0xff]
    %v155 = vld [vmem:[#allocation5 + $0x10] sm:$0xff]
    %v156 = vld [vmem:[#allocation5 + $0x18] sm:$0xff]
    %v157 = vld [vmem:[#allocation5 + $0x20] sm:$0xff]
    %v158 = vld [vmem:[#allocation5 + $0x28] sm:$0xff]
    %v159 = vld [vmem:[#allocation5 + $0x30] sm:$0xff]
    %v160 = vld [vmem:[#allocation5 + $0x38] sm:$0xff]
    %v161 = vld [vmem:[#allocation5 + $0x40] sm:$0xff]
    %v162 = vld [vmem:[#allocation5 + $0x48] sm:$0xff]
    %v163 = vld [vmem:[#allocation5 + $0x50] sm:$0xff]
    %v164 = vld [vmem:[#allocation5 + $0x58] sm:$0xff]
    %v165 = vld [vmem:[#allocation5 + $0x60] sm:$0xff]
    %v166 = vld [vmem:[#allocation5 + $0x68] sm:$0xff]
    %v167 = vld [vmem:[#allocation5 + $0x70] sm:$0xff]
    %v168 = vld [vmem:[#allocation5 + $0x78] sm:$0xff]
    %v169 = vld [vmem:[#allocation7] sm:$0x1]
    %v171 = vlaneseq
    %v172 = vshrl.u32 %v171, 7
    %v173 = vsub.s32 0, %v172
    %v174 = vrot.slane %v169, %v173
    %176 = vmatprep.subr.mxu0 0.0
    %177 = vmatpush1.msra.mxu0 %v168
    %178 = vmatprep.subr.mxu0 0.0
    %179 = vmatpush1.msra.mxu0 %v167
    %180 = vmatprep.subr.mxu0 0.0
    %181 = vmatpush1.msra.mxu0 %v166
    %182 = vmatprep.subr.mxu0 0.0
    %183 = vmatpush1.msra.mxu0 %v165
    %184 = vmatprep.subr.mxu0 0.0
    %185 = vmatpush1.msra.mxu0 %v164
    %186 = vmatprep.subr.mxu0 0.0
    %187 = vmatpush1.msra.mxu0 %v163
    %188 = vmatprep.subr.mxu0 0.0
    %189 = vmatpush1.msra.mxu0 %v162
    %190 = vmatprep.subr.mxu0 0.0
    %191 = vmatpush1.msra.mxu0 %v161
    %192 = vmatprep.subr.mxu0 0.0
    %193 = vmatpush1.msra.mxu0 %v160
    %194 = vmatprep.subr.mxu0 0.0
    %195 = vmatpush1.msra.mxu0 %v159
    %196 = vmatprep.subr.mxu0 0.0
    %197 = vmatpush1.msra.mxu0 %v158
    %198 = vmatprep.subr.mxu0 0.0
    %199 = vmatpush1.msra.mxu0 %v157
    %200 = vmatprep.subr.mxu0 0.0
    %201 = vmatpush1.msra.mxu0 %v156
    %202 = vmatprep.subr.mxu0 0.0
    %203 = vmatpush1.msra.mxu0 %v155
    %204 = vmatprep.subr.mxu0 0.0
    %205 = vmatpush1.msra.mxu0 %v154
    %206 = vmatprep.subr.mxu0 0.0
    %207 = vmatpush1.msra.mxu0 %v153
    %208 = vmatprep.subr.mxu0 0.0
    %209 = vmatpush2.msra.mxu0 0.0
    %210 = vmatprep.subr.mxu0 0.0
    %211 = vmatpush2.msra.mxu0 0.0
    %212 = vmatprep.subr.mxu0 0.0
    %213 = vmatpush2.msra.mxu0 0.0
    %214 = vmatprep.subr.mxu0 0.0
    %215 = vmatpush2.msra.mxu0 0.0
    %216 = vmatprep.subr.mxu0 0.0
    %217 = vmatpush2.msra.mxu0 0.0
    %218 = vmatprep.subr.mxu0 0.0
    %219 = vmatpush2.msra.mxu0 0.0
    %220 = vmatprep.subr.mxu0 0.0
    %221 = vmatpush2.msra.mxu0 0.0
    %222 = vmatprep.subr.mxu0 0.0
    %223 = vmatpush2.msra.mxu0 0.0
    %224 = vmatprep.subr.mxu0 0.0
    %225 = vmatpush2.msra.mxu0 0.0
    %226 = vmatprep.subr.mxu0 0.0
    %227 = vmatpush2.msra.mxu0 0.0
    %228 = vmatprep.subr.mxu0 0.0
    %229 = vmatpush2.msra.mxu0 0.0
    %230 = vmatprep.subr.mxu0 0.0
    %231 = vmatpush2.msra.mxu0 0.0
    %232 = vmatprep.subr.mxu0 0.0
    %233 = vmatpush2.msra.mxu0 0.0
    %234 = vmatprep.subr.mxu0 0.0
    %235 = vmatpush2.msra.mxu0 0.0
    %236 = vmatprep.subr.mxu0 0.0
    %237 = vmatpush2.msra.mxu0 0.0
    %238 = vmatprep.subr.mxu0 0.0
    %239 = vmatpush2.msra.mxu0 0.0
    %240 = vmatprep.mubr.f32.mxu0 0.0
    %241 = vmatmul.mubr.f32.gmra.mxu0 %v151
    %v242 = vpop.f32.mrf.mxu0
    %v243 = vadd.f32 %v174, %v242
    %v244 = vpop.f32.mrf.mxu0
    %245 = vmatprep.mubr.f32.mxu0 0.0
    %246 = vmatmul.mubr.f32.gmra.mxu0 %v152
    %v247 = vpop.f32.mrf.mxu0
    %v248 = vadd.f32 %v174, %v247
    %v249 = vpop.f32.mrf.mxu0
    %250 = vdwg.mxu0
    %v251 = vld [vmem:[#allocation2] sm:$0xff]
    %v252 = vld [vmem:[#allocation8] sm:$0xff]
    %v253 = vld [vmem:[#allocation8 + $0x8] sm:$0xff]
    %v254 = vld [vmem:[#allocation8 + $0x10] sm:$0xff]
    %v255 = vld [vmem:[#allocation8 + $0x18] sm:$0xff]
    %v256 = vld [vmem:[#allocation8 + $0x20] sm:$0xff]
    %v257 = vld [vmem:[#allocation8 + $0x28] sm:$0xff]
    %v258 = vld [vmem:[#allocation8 + $0x30] sm:$0xff]
    %v259 = vld [vmem:[#allocation8 + $0x38] sm:$0xff]
    %v260 = vld [vmem:[#allocation8 + $0x40] sm:$0xff]
    %v261 = vld [vmem:[#allocation8 + $0x48] sm:$0xff]
    %v262 = vld [vmem:[#allocation8 + $0x50] sm:$0xff]
    %v263 = vld [vmem:[#allocation8 + $0x58] sm:$0xff]
    %v264 = vld [vmem:[#allocation8 + $0x60] sm:$0xff]
    %v265 = vld [vmem:[#allocation8 + $0x68] sm:$0xff]
    %v266 = vld [vmem:[#allocation8 + $0x70] sm:$0xff]
    %v267 = vld [vmem:[#allocation8 + $0x78] sm:$0xff]
    %v268 = vld [vmem:[#allocation10] sm:$0x1]
    %v270 = vlaneseq
    %v271 = vshrl.u32 %v270, 7
    %v272 = vsub.s32 0, %v271
    %v273 = vrot.slane %v268, %v272
    %275 = vmatprep.subr.mxu0 0.0
    %276 = vmatpush1.msra.mxu0 %v267
    %277 = vmatprep.subr.mxu0 0.0
    %278 = vmatpush1.msra.mxu0 %v266
    %279 = vmatprep.subr.mxu0 0.0
    %280 = vmatpush1.msra.mxu0 %v265
    %281 = vmatprep.subr.mxu0 0.0
    %282 = vmatpush1.msra.mxu0 %v264
    %283 = vmatprep.subr.mxu0 0.0
    %284 = vmatpush1.msra.mxu0 %v263
    %285 = vmatprep.subr.mxu0 0.0
    %286 = vmatpush1.msra.mxu0 %v262
    %287 = vmatprep.subr.mxu0 0.0
    %288 = vmatpush1.msra.mxu0 %v261
    %289 = vmatprep.subr.mxu0 0.0
    %290 = vmatpush1.msra.mxu0 %v260
    %291 = vmatprep.subr.mxu0 0.0
    %292 = vmatpush1.msra.mxu0 %v259
    %293 = vmatprep.subr.mxu0 0.0
    %294 = vmatpush1.msra.mxu0 %v258
    %295 = vmatprep.subr.mxu0 0.0
    %296 = vmatpush1.msra.mxu0 %v257
    %297 = vmatprep.subr.mxu0 0.0
    %298 = vmatpush1.msra.mxu0 %v256
    %299 = vmatprep.subr.mxu0 0.0
    %300 = vmatpush1.msra.mxu0 %v255
    %301 = vmatprep.subr.mxu0 0.0
    %302 = vmatpush1.msra.mxu0 %v254
    %303 = vmatprep.subr.mxu0 0.0
    %304 = vmatpush1.msra.mxu0 %v253
    %305 = vmatprep.subr.mxu0 0.0
    %306 = vmatpush1.msra.mxu0 %v252
    %307 = vmatprep.subr.mxu0 0.0
    %308 = vmatpush2.msra.mxu0 0.0
    %309 = vmatprep.subr.mxu0 0.0
    %310 = vmatpush2.msra.mxu0 0.0
    %311 = vmatprep.subr.mxu0 0.0
    %312 = vmatpush2.msra.mxu0 0.0
    %313 = vmatprep.subr.mxu0 0.0
    %314 = vmatpush2.msra.mxu0 0.0
    %315 = vmatprep.subr.mxu0 0.0
    %316 = vmatpush2.msra.mxu0 0.0
    %317 = vmatprep.subr.mxu0 0.0
    %318 = vmatpush2.msra.mxu0 0.0
    %319 = vmatprep.subr.mxu0 0.0
    %320 = vmatpush2.msra.mxu0 0.0
    %321 = vmatprep.subr.mxu0 0.0
    %322 = vmatpush2.msra.mxu0 0.0
    %323 = vmatprep.subr.mxu0 0.0
    %324 = vmatpush2.msra.mxu0 0.0
    %325 = vmatprep.subr.mxu0 0.0
    %326 = vmatpush2.msra.mxu0 0.0
    %327 = vmatprep.subr.mxu0 0.0
    %328 = vmatpush2.msra.mxu0 0.0
    %329 = vmatprep.subr.mxu0 0.0
    %330 = vmatpush2.msra.mxu0 0.0
    %331 = vmatprep.subr.mxu0 0.0
    %332 = vmatpush2.msra.mxu0 0.0
    %333 = vmatprep.subr.mxu0 0.0
    %334 = vmatpush2.msra.mxu0 0.0
    %335 = vmatprep.subr.mxu0 0.0
    %336 = vmatpush2.msra.mxu0 0.0
    %337 = vmatprep.subr.mxu0 0.0
    %338 = vmatpush2.msra.mxu0 0.0
    %339 = vmatprep.mubr.f32.mxu0 0.0
    %340 = vmatmul.mubr.f32.gmra.mxu0 %v251
    %v341 = vpop.f32.mrf.mxu0
    %v342 = vadd.f32 %v273, %v341
    %v343 = vpop.f32.mrf.mxu0
    %344 = vdwg.mxu0
    %v345 = vld [vmem:[%s6] sm:$0xff]
    %v346 = vld [vmem:[%s6 + $0x8] sm:$0xff]
    %v347 = vld [vmem:[%s7] sm:$0xff]
    %v348 = vld [vmem:[%s7 + $0x8] sm:$0xff]
    %v349 = vld [vmem:[#allocation11] sm:$0xff]
    %vm350 = vcmask 130048
    %v352 = vsel %vm350, %v345, 0
    %v355 = vsel %vm350, %v346, 0
    %357 = vmatprep.subr.mxu0 0.0
    %358 = vmatpush1.msra.mxu0 0.0
    %359 = vmatprep.subr.mxu0 0.0
    %360 = vmatpush1.msra.mxu0 0.0
    %361 = vmatprep.subr.mxu0 0.0
    %362 = vmatpush1.msra.mxu0 0.0
    %363 = vmatprep.subr.mxu0 0.0
    %364 = vmatpush1.msra.mxu0 0.0
    %365 = vmatprep.subr.mxu0 0.0
    %366 = vmatpush1.msra.mxu0 0.0
    %367 = vmatprep.subr.mxu0 0.0
    %368 = vmatpush1.msra.mxu0 0.0
    %369 = vmatprep.subr.mxu0 0.0
    %370 = vmatpush1.msra.mxu0 0.0
    %371 = vmatprep.subr.mxu0 0.0
    %372 = vmatpush1.msra.mxu0 0.0
    %373 = vmatprep.subr.mxu0 0.0
    %374 = vmatpush1.msra.mxu0 0.0
    %375 = vmatprep.subr.mxu0 0.0
    %376 = vmatpush1.msra.mxu0 0.0
    %377 = vmatprep.subr.mxu0 0.0
    %378 = vmatpush1.msra.mxu0 0.0
    %379 = vmatprep.subr.mxu0 0.0
    %380 = vmatpush1.msra.mxu0 0.0
    %381 = vmatprep.subr.mxu0 0.0
    %382 = vmatpush1.msra.mxu0 0.0
    %383 = vmatprep.subr.mxu0 0.0
    %384 = vmatpush1.msra.mxu0 0.0
    %385 = vmatprep.subr.mxu0 0.0
    %386 = vmatpush1.msra.mxu0 %v248
    %387 = vmatprep.subr.mxu0 0.0
    %388 = vmatpush1.msra.mxu0 %v243
    %389 = vmatprep.subr.mxu0 0.0
    %390 = vmatpush2.msra.mxu0 0.0
    %391 = vmatprep.subr.mxu0 0.0
    %392 = vmatpush2.msra.mxu0 0.0
    %393 = vmatprep.subr.mxu0 0.0
    %394 = vmatpush2.msra.mxu0 0.0
    %395 = vmatprep.subr.mxu0 0.0
    %396 = vmatpush2.msra.mxu0 0.0
    %397 = vmatprep.subr.mxu0 0.0
    %398 = vmatpush2.msra.mxu0 0.0
    %399 = vmatprep.subr.mxu0 0.0
    %400 = vmatpush2.msra.mxu0 0.0
    %401 = vmatprep.subr.mxu0 0.0
    %402 = vmatpush2.msra.mxu0 0.0
    %403 = vmatprep.subr.mxu0 0.0
    %404 = vmatpush2.msra.mxu0 0.0
    %405 = vmatprep.subr.mxu0 0.0
    %406 = vmatpush2.msra.mxu0 0.0
    %407 = vmatprep.subr.mxu0 0.0
    %408 = vmatpush2.msra.mxu0 0.0
    %409 = vmatprep.subr.mxu0 0.0
    %410 = vmatpush2.msra.mxu0 0.0
    %411 = vmatprep.subr.mxu0 0.0
    %412 = vmatpush2.msra.mxu0 0.0
    %413 = vmatprep.subr.mxu0 0.0
    %414 = vmatpush2.msra.mxu0 0.0
    %415 = vmatprep.subr.mxu0 0.0
    %416 = vmatpush2.msra.mxu0 0.0
    %417 = vmatprep.subr.mxu0 0.0
    %418 = vmatpush2.msra.mxu0 0.0
    %419 = vmatprep.subr.mxu0 0.0
    %420 = vmatpush2.msra.mxu0 0.0
    %421 = vmatprep.mubr.f32.mxu0 0.0
    %422 = vmatmul.mubr.f32.gmra.mxu0 %v352
    %v423 = vpop.f32.mrf.mxu0
    %v424 = vadd.f32 0.0, %v423
    %v425 = vpop.f32.mrf.mxu0
    %426 = vmatprep.mubr.f32.mxu0 0.0
    %427 = vmatmul.mubr.f32.gmra.mxu0 %v355
    %v428 = vpop.f32.mrf.mxu0
    %v429 = vadd.f32 0.0, %v428
    %v430 = vpop.f32.mrf.mxu0
    %431 = vdwg.mxu0
    %vm432 = vcmask 64512
    %v434 = vsel %vm432, %v347, 0
    %v437 = vsel %vm432, %v348, 0
    %439 = vmatprep.subr.mxu0 0.0
    %440 = vmatpush1.msra.mxu0 0.0
    %441 = vmatprep.subr.mxu0 0.0
    %442 = vmatpush1.msra.mxu0 0.0
    %443 = vmatprep.subr.mxu0 0.0
    %444 = vmatpush1.msra.mxu0 0.0
    %445 = vmatprep.subr.mxu0 0.0
    %446 = vmatpush1.msra.mxu0 0.0
    %447 = vmatprep.subr.mxu0 0.0
    %448 = vmatpush1.msra.mxu0 0.0
    %449 = vmatprep.subr.mxu0 0.0
    %450 = vmatpush1.msra.mxu0 0.0
    %451 = vmatprep.subr.mxu0 0.0
    %452 = vmatpush1.msra.mxu0 0.0
    %453 = vmatprep.subr.mxu0 0.0
    %454 = vmatpush1.msra.mxu0 0.0
    %455 = vmatprep.subr.mxu0 0.0
    %456 = vmatpush1.msra.mxu0 0.0
    %457 = vmatprep.subr.mxu0 0.0
    %458 = vmatpush1.msra.mxu0 0.0
    %459 = vmatprep.subr.mxu0 0.0
    %460 = vmatpush1.msra.mxu0 0.0
    %461 = vmatprep.subr.mxu0 0.0
    %462 = vmatpush1.msra.mxu0 0.0
    %463 = vmatprep.subr.mxu0 0.0
    %464 = vmatpush1.msra.mxu0 0.0
    %465 = vmatprep.subr.mxu0 0.0
    %466 = vmatpush1.msra.mxu0 0.0
    %467 = vmatprep.subr.mxu0 0.0
    %468 = vmatpush1.msra.mxu0 0.0
    %469 = vmatprep.subr.mxu0 0.0
    %470 = vmatpush1.msra.mxu0 %v342
    %471 = vmatprep.subr.mxu0 0.0
    %472 = vmatpush2.msra.mxu0 0.0
    %473 = vmatprep.subr.mxu0 0.0
    %474 = vmatpush2.msra.mxu0 0.0
    %475 = vmatprep.subr.mxu0 0.0
    %476 = vmatpush2.msra.mxu0 0.0
    %477 = vmatprep.subr.mxu0 0.0
    %478 = vmatpush2.msra.mxu0 0.0
    %479 = vmatprep.subr.mxu0 0.0
    %480 = vmatpush2.msra.mxu0 0.0
    %481 = vmatprep.subr.mxu0 0.0
    %482 = vmatpush2.msra.mxu0 0.0
    %483 = vmatprep.subr.mxu0 0.0
    %484 = vmatpush2.msra.mxu0 0.0
    %485 = vmatprep.subr.mxu0 0.0
    %486 = vmatpush2.msra.mxu0 0.0
    %487 = vmatprep.subr.mxu0 0.0
    %488 = vmatpush2.msra.mxu0 0.0
    %489 = vmatprep.subr.mxu0 0.0
    %490 = vmatpush2.msra.mxu0 0.0
    %491 = vmatprep.subr.mxu0 0.0
    %492 = vmatpush2.msra.mxu0 0.0
    %493 = vmatprep.subr.mxu0 0.0
    %494 = vmatpush2.msra.mxu0 0.0
    %495 = vmatprep.subr.mxu0 0.0
    %496 = vmatpush2.msra.mxu0 0.0
    %497 = vmatprep.subr.mxu0 0.0
    %498 = vmatpush2.msra.mxu0 0.0
    %499 = vmatprep.subr.mxu0 0.0
    %500 = vmatpush2.msra.mxu0 0.0
    %501 = vmatprep.subr.mxu0 0.0
    %502 = vmatpush2.msra.mxu0 0.0
    %503 = vmatprep.mubr.f32.mxu0 0.0
    %504 = vmatmul.mubr.f32.gmra.mxu0 %v434
    %v505 = vpop.f32.mrf.mxu0
    %v506 = vadd.f32 0.0, %v505
    %v507 = vpop.f32.mrf.mxu0
    %508 = vmatprep.mubr.f32.mxu0 0.0
    %509 = vmatmul.mubr.f32.gmra.mxu0 %v437
    %v510 = vpop.f32.mrf.mxu0
    %v511 = vadd.f32 0.0, %v510
    %v512 = vpop.f32.mrf.mxu0
    %513 = vdwg.mxu0
    %v515 = vsel %vm350, %v349, 0
    %517 = vmatprep.subr.mxu0 0.0
    %518 = vmatpush1.msra.mxu0 0.0
    %519 = vmatprep.subr.mxu0 0.0
    %520 = vmatpush1.msra.mxu0 0.0
    %521 = vmatprep.subr.mxu0 0.0
    %522 = vmatpush1.msra.mxu0 0.0
    %523 = vmatprep.subr.mxu0 0.0
    %524 = vmatpush1.msra.mxu0 0.0
    %525 = vmatprep.subr.mxu0 0.0
    %526 = vmatpush1.msra.mxu0 0.0
    %527 = vmatprep.subr.mxu0 0.0
    %528 = vmatpush1.msra.mxu0 0.0
    %529 = vmatprep.subr.mxu0 0.0
    %530 = vmatpush1.msra.mxu0 0.0
    %531 = vmatprep.subr.mxu0 0.0
    %532 = vmatpush1.msra.mxu0 0.0
    %533 = vmatprep.subr.mxu0 0.0
    %534 = vmatpush1.msra.mxu0 0.0
    %535 = vmatprep.subr.mxu0 0.0
    %536 = vmatpush1.msra.mxu0 0.0
    %537 = vmatprep.subr.mxu0 0.0
    %538 = vmatpush1.msra.mxu0 0.0
    %539 = vmatprep.subr.mxu0 0.0
    %540 = vmatpush1.msra.mxu0 0.0
    %541 = vmatprep.subr.mxu0 0.0
    %542 = vmatpush1.msra.mxu0 0.0
    %543 = vmatprep.subr.mxu0 0.0
    %544 = vmatpush1.msra.mxu0 0.0
    %545 = vmatprep.subr.mxu0 0.0
    %546 = vmatpush1.msra.mxu0 %v248
    %547 = vmatprep.subr.mxu0 0.0
    %548 = vmatpush1.msra.mxu0 %v243
    %549 = vmatprep.subr.mxu0 0.0
    %550 = vmatpush2.msra.mxu0 0.0
    %551 = vmatprep.subr.mxu0 0.0
    %552 = vmatpush2.msra.mxu0 0.0
    %553 = vmatprep.subr.mxu0 0.0
    %554 = vmatpush2.msra.mxu0 0.0
    %555 = vmatprep.subr.mxu0 0.0
    %556 = vmatpush2.msra.mxu0 0.0
    %557 = vmatprep.subr.mxu0 0.0
    %558 = vmatpush2.msra.mxu0 0.0
    %559 = vmatprep.subr.mxu0 0.0
    %560 = vmatpush2.msra.mxu0 0.0
    %561 = vmatprep.subr.mxu0 0.0
    %562 = vmatpush2.msra.mxu0 0.0
    %563 = vmatprep.subr.mxu0 0.0
    %564 = vmatpush2.msra.mxu0 0.0
    %565 = vmatprep.subr.mxu0 0.0
    %566 = vmatpush2.msra.mxu0 0.0
    %567 = vmatprep.subr.mxu0 0.0
    %568 = vmatpush2.msra.mxu0 0.0
    %569 = vmatprep.subr.mxu0 0.0
    %570 = vmatpush2.msra.mxu0 0.0
    %571 = vmatprep.subr.mxu0 0.0
    %572 = vmatpush2.msra.mxu0 0.0
    %573 = vmatprep.subr.mxu0 0.0
    %574 = vmatpush2.msra.mxu0 0.0
    %575 = vmatprep.subr.mxu0 0.0
    %576 = vmatpush2.msra.mxu0 0.0
    %577 = vmatprep.subr.mxu0 0.0
    %578 = vmatpush2.msra.mxu0 0.0
    %579 = vmatprep.subr.mxu0 0.0
    %580 = vmatpush2.msra.mxu0 0.0
    %581 = vmatprep.mubr.f32.mxu0 0.0
    %582 = vmatmul.mubr.f32.gmra.mxu0 %v515
    %v583 = vpop.f32.mrf.mxu0
    %v584 = vadd.f32 0.0, %v583
    %v585 = vpop.f32.mrf.mxu0
    %586 = vdwg.mxu0
    %v587 = vld [vmem:[#allocation13] sm:$0xff]
    %v588 = vld [vmem:[#allocation13 + $0x8] sm:$0xff]
    %v589 = vld [vmem:[#allocation13 + $0x10] sm:$0xff]
    %v590 = vld [vmem:[#allocation13 + $0x18] sm:$0xff]
    %v591 = vld [vmem:[#allocation13 + $0x20] sm:$0xff]
    %v592 = vld [vmem:[#allocation13 + $0x28] sm:$0xff]
    %v593 = vld [vmem:[#allocation13 + $0x30] sm:$0xff]
    %v594 = vld [vmem:[#allocation13 + $0x38] sm:$0xff]
    %v595 = vld [vmem:[#allocation13 + $0x40] sm:$0xff]
    %v596 = vld [vmem:[#allocation13 + $0x48] sm:$0xff]
    %v597 = vld [vmem:[#allocation13 + $0x50] sm:$0xff]
    %v598 = vld [vmem:[#allocation13 + $0x58] sm:$0xff]
    %v599 = vld [vmem:[#allocation13 + $0x60] sm:$0xff]
    %v600 = vld [vmem:[#allocation13 + $0x68] sm:$0xff]
    %v601 = vld [vmem:[#allocation13 + $0x70] sm:$0xff]
    %v602 = vld [vmem:[#allocation13 + $0x78] sm:$0xff]
    %v603 = vld [vmem:[#allocation13 + $0x80] sm:$0xff]
    %v604 = vld [vmem:[#allocation13 + $0x88] sm:$0xff]
    %v605 = vld [vmem:[#allocation13 + $0x90] sm:$0xff]
    %v606 = vld [vmem:[#allocation13 + $0x98] sm:$0xff]
    %v607 = vld [vmem:[#allocation13 + $0xa0] sm:$0xff]
    %v608 = vld [vmem:[#allocation13 + $0xa8] sm:$0xff]
    %v609 = vld [vmem:[#allocation13 + $0xb0] sm:$0xff]
    %v610 = vld [vmem:[#allocation13 + $0xb8] sm:$0xff]
    %v611 = vld [vmem:[#allocation13 + $0xc0] sm:$0xff]
    %v612 = vld [vmem:[#allocation13 + $0xc8] sm:$0xff]
    %v613 = vld [vmem:[#allocation13 + $0xd0] sm:$0xff]
    %v614 = vld [vmem:[#allocation13 + $0xd8] sm:$0xff]
    %v615 = vld [vmem:[#allocation13 + $0xe0] sm:$0xff]
    %v616 = vld [vmem:[#allocation13 + $0xe8] sm:$0xff]
    %v617 = vld [vmem:[#allocation13 + $0xf0] sm:$0xff]
    %v618 = vld [vmem:[#allocation13 + $0xf8] sm:$0xff]
    %v619 = vld [vmem:[#allocation13 + $0x100] sm:$0xff]
    %v620 = vld [vmem:[#allocation13 + $0x108] sm:$0xff]
    %v621 = vld [vmem:[#allocation13 + $0x110] sm:$0xff]
    %v622 = vld [vmem:[#allocation13 + $0x118] sm:$0xff]
    %v623 = vld [vmem:[#allocation13 + $0x120] sm:$0xff]
    %v624 = vld [vmem:[#allocation13 + $0x128] sm:$0xff]
    %v625 = vld [vmem:[#allocation13 + $0x130] sm:$0xff]
    %v626 = vld [vmem:[#allocation13 + $0x138] sm:$0xff]
    %v627 = vld [vmem:[#allocation13 + $0x140] sm:$0xff]
    %v628 = vld [vmem:[#allocation13 + $0x148] sm:$0xff]
    %v629 = vld [vmem:[#allocation13 + $0x150] sm:$0xff]
    %v630 = vld [vmem:[#allocation13 + $0x158] sm:$0xff]
    %v631 = vld [vmem:[#allocation13 + $0x160] sm:$0xff]
    %v632 = vld [vmem:[#allocation13 + $0x168] sm:$0xff]
    %v633 = vld [vmem:[#allocation13 + $0x170] sm:$0xff]
    %v634 = vld [vmem:[#allocation13 + $0x178] sm:$0xff]
    %v635 = vld [vmem:[%s11] sm:$0x1]
    %v637 = vlaneseq
    %v638 = vshrl.u32 %v637, 7
    %v639 = vsub.s32 0, %v638
    %v640 = vrot.slane %v635, %v639
    %642 = vmatprep.subr.mxu0 0.0
    %643 = vmatpush1.msra.mxu0 %v602
    %644 = vmatprep.subr.mxu0 0.0
    %645 = vmatpush1.msra.mxu0 %v601
    %646 = vmatprep.subr.mxu0 0.0
    %647 = vmatpush1.msra.mxu0 %v600
    %648 = vmatprep.subr.mxu0 0.0
    %649 = vmatpush1.msra.mxu0 %v599
    %650 = vmatprep.subr.mxu0 0.0
    %651 = vmatpush1.msra.mxu0 %v598
    %652 = vmatprep.subr.mxu0 0.0
    %653 = vmatpush1.msra.mxu0 %v597
    %654 = vmatprep.subr.mxu0 0.0
    %655 = vmatpush1.msra.mxu0 %v596
    %656 = vmatprep.subr.mxu0 0.0
    %657 = vmatpush1.msra.mxu0 %v595
    %658 = vmatprep.subr.mxu0 0.0
    %659 = vmatpush1.msra.mxu0 %v594
    %660 = vmatprep.subr.mxu0 0.0
    %661 = vmatpush1.msra.mxu0 %v593
    %662 = vmatprep.subr.mxu0 0.0
    %663 = vmatpush1.msra.mxu0 %v592
    %664 = vmatprep.subr.mxu0 0.0
    %665 = vmatpush1.msra.mxu0 %v591
    %666 = vmatprep.subr.mxu0 0.0
    %667 = vmatpush1.msra.mxu0 %v590
    %668 = vmatprep.subr.mxu0 0.0
    %669 = vmatpush1.msra.mxu0 %v589
    %670 = vmatprep.subr.mxu0 0.0
    %671 = vmatpush1.msra.mxu0 %v588
    %672 = vmatprep.subr.mxu0 0.0
    %673 = vmatpush1.msra.mxu0 %v587
    %674 = vmatprep.subr.mxu0 0.0
    %675 = vmatpush2.msra.mxu0 %v618
    %676 = vmatprep.subr.mxu0 0.0
    %677 = vmatpush2.msra.mxu0 %v617
    %678 = vmatprep.subr.mxu0 0.0
    %679 = vmatpush2.msra.mxu0 %v616
    %680 = vmatprep.subr.mxu0 0.0
    %681 = vmatpush2.msra.mxu0 %v615
    %682 = vmatprep.subr.mxu0 0.0
    %683 = vmatpush2.msra.mxu0 %v614
    %684 = vmatprep.subr.mxu0 0.0
    %685 = vmatpush2.msra.mxu0 %v613
    %686 = vmatprep.subr.mxu0 0.0
    %687 = vmatpush2.msra.mxu0 %v612
    %688 = vmatprep.subr.mxu0 0.0
    %689 = vmatpush2.msra.mxu0 %v611
    %690 = vmatprep.subr.mxu0 0.0
    %691 = vmatpush2.msra.mxu0 %v610
    %692 = vmatprep.subr.mxu0 0.0
    %693 = vmatpush2.msra.mxu0 %v609
    %694 = vmatprep.subr.mxu0 0.0
    %695 = vmatpush2.msra.mxu0 %v608
    %696 = vmatprep.subr.mxu0 0.0
    %697 = vmatpush2.msra.mxu0 %v607
    %698 = vmatprep.subr.mxu0 0.0
    %699 = vmatpush2.msra.mxu0 %v606
    %700 = vmatprep.subr.mxu0 0.0
    %701 = vmatpush2.msra.mxu0 %v605
    %702 = vmatprep.subr.mxu0 0.0
    %703 = vmatpush2.msra.mxu0 %v604
    %704 = vmatprep.subr.mxu0 0.0
    %705 = vmatpush2.msra.mxu0 %v603
    %706 = vmatprep.mubr.f32.mxu0 %v506
    %707 = vmatmul.mubr.f32.gmra.mxu0 %v424
    %v708 = vpop.f32.mrf.mxu0
    %v709 = vadd.f32 %v640, %v708
    %v710 = vpop.f32.mrf.mxu0
    %711 = vmatprep.mubr.f32.mxu0 %v511
    %712 = vmatmul.mubr.f32.gmra.mxu0 %v429
    %v713 = vpop.f32.mrf.mxu0
    %v714 = vadd.f32 %v640, %v713
    %v715 = vpop.f32.mrf.mxu0
    %716 = vdwg.mxu0
    %717 = vmatprep.subr.mxu0 0.0
    %718 = vmatpush1.msra.mxu0 %v634
    %719 = vmatprep.subr.mxu0 0.0
    %720 = vmatpush1.msra.mxu0 %v633
    %721 = vmatprep.subr.mxu0 0.0
    %722 = vmatpush1.msra.mxu0 %v632
    %723 = vmatprep.subr.mxu0 0.0
    %724 = vmatpush1.msra.mxu0 %v631
    %725 = vmatprep.subr.mxu0 0.0
    %726 = vmatpush1.msra.mxu0 %v630
    %727 = vmatprep.subr.mxu0 0.0
    %728 = vmatpush1.msra.mxu0 %v629
    %729 = vmatprep.subr.mxu0 0.0
    %730 = vmatpush1.msra.mxu0 %v628
    %731 = vmatprep.subr.mxu0 0.0
    %732 = vmatpush1.msra.mxu0 %v627
    %733 = vmatprep.subr.mxu0 0.0
    %734 = vmatpush1.msra.mxu0 %v626
    %735 = vmatprep.subr.mxu0 0.0
    %736 = vmatpush1.msra.mxu0 %v625
    %737 = vmatprep.subr.mxu0 0.0
    %738 = vmatpush1.msra.mxu0 %v624
    %739 = vmatprep.subr.mxu0 0.0
    %740 = vmatpush1.msra.mxu0 %v623
    %741 = vmatprep.subr.mxu0 0.0
    %742 = vmatpush1.msra.mxu0 %v622
    %743 = vmatprep.subr.mxu0 0.0
    %744 = vmatpush1.msra.mxu0 %v621
    %745 = vmatprep.subr.mxu0 0.0
    %746 = vmatpush1.msra.mxu0 %v620
    %747 = vmatprep.subr.mxu0 0.0
    %748 = vmatpush1.msra.mxu0 %v619
    %749 = vmatprep.subr.mxu0 0.0
    %750 = vmatpush2.msra.mxu0 0.0
    %751 = vmatprep.subr.mxu0 0.0
    %752 = vmatpush2.msra.mxu0 0.0
    %753 = vmatprep.subr.mxu0 0.0
    %754 = vmatpush2.msra.mxu0 0.0
    %755 = vmatprep.subr.mxu0 0.0
    %756 = vmatpush2.msra.mxu0 0.0
    %757 = vmatprep.subr.mxu0 0.0
    %758 = vmatpush2.msra.mxu0 0.0
    %759 = vmatprep.subr.mxu0 0.0
    %760 = vmatpush2.msra.mxu0 0.0
    %761 = vmatprep.subr.mxu0 0.0
    %762 = vmatpush2.msra.mxu0 0.0
    %763 = vmatprep.subr.mxu0 0.0
    %764 = vmatpush2.msra.mxu0 0.0
    %765 = vmatprep.subr.mxu0 0.0
    %766 = vmatpush2.msra.mxu0 0.0
    %767 = vmatprep.subr.mxu0 0.0
    %768 = vmatpush2.msra.mxu0 0.0
    %769 = vmatprep.subr.mxu0 0.0
    %770 = vmatpush2.msra.mxu0 0.0
    %771 = vmatprep.subr.mxu0 0.0
    %772 = vmatpush2.msra.mxu0 0.0
    %773 = vmatprep.subr.mxu0 0.0
    %774 = vmatpush2.msra.mxu0 0.0
    %775 = vmatprep.subr.mxu0 0.0
    %776 = vmatpush2.msra.mxu0 0.0
    %777 = vmatprep.subr.mxu0 0.0
    %778 = vmatpush2.msra.mxu0 0.0
    %779 = vmatprep.subr.mxu0 0.0
    %780 = vmatpush2.msra.mxu0 0.0
    %781 = vmatprep.mubr.f32.mxu0 0.0
    %782 = vmatmul.mubr.f32.gmra.mxu0 %v243
    %v783 = vpop.f32.mrf.mxu0
    %v784 = vadd.f32 %v709, %v783
    %v785 = vpop.f32.mrf.mxu0
    %786 = vmatprep.mubr.f32.mxu0 0.0
    %787 = vmatmul.mubr.f32.gmra.mxu0 %v248
    %v788 = vpop.f32.mrf.mxu0
    %v789 = vadd.f32 %v714, %v788
    %v790 = vpop.f32.mrf.mxu0
    %791 = vdwg.mxu0
    %v792 = vld [vmem:[#allocation14] sm:$0xff]
    %v793 = vld [vmem:[#allocation14 + $0x8] sm:$0xff]
    %v794 = vld [vmem:[#allocation14 + $0x10] sm:$0xff]
    %v795 = vld [vmem:[#allocation14 + $0x18] sm:$0xff]
    %v796 = vld [vmem:[#allocation14 + $0x20] sm:$0xff]
    %v797 = vld [vmem:[#allocation14 + $0x28] sm:$0xff]
    %v798 = vld [vmem:[#allocation14 + $0x30] sm:$0xff]
    %v799 = vld [vmem:[#allocation14 + $0x38] sm:$0xff]
    %v800 = vld [vmem:[#allocation14 + $0x40] sm:$0xff]
    %v801 = vld [vmem:[#allocation14 + $0x48] sm:$0xff]
    %v802 = vld [vmem:[#allocation14 + $0x50] sm:$0xff]
    %v803 = vld [vmem:[#allocation14 + $0x58] sm:$0xff]
    %v804 = vld [vmem:[#allocation14 + $0x60] sm:$0xff]
    %v805 = vld [vmem:[#allocation14 + $0x68] sm:$0xff]
    %v806 = vld [vmem:[#allocation14 + $0x70] sm:$0xff]
    %v807 = vld [vmem:[#allocation14 + $0x78] sm:$0xff]
    %v808 = vld [vmem:[#allocation14 + $0x80] sm:$0xff]
    %v809 = vld [vmem:[#allocation14 + $0x88] sm:$0xff]
    %v810 = vld [vmem:[#allocation14 + $0x90] sm:$0xff]
    %v811 = vld [vmem:[#allocation14 + $0x98] sm:$0xff]
    %v812 = vld [vmem:[#allocation14 + $0xa0] sm:$0xff]
    %v813 = vld [vmem:[#allocation14 + $0xa8] sm:$0xff]
    %v814 = vld [vmem:[#allocation14 + $0xb0] sm:$0xff]
    %v815 = vld [vmem:[#allocation14 + $0xb8] sm:$0xff]
    %v816 = vld [vmem:[#allocation14 + $0xc0] sm:$0xff]
    %v817 = vld [vmem:[#allocation14 + $0xc8] sm:$0xff]
    %v818 = vld [vmem:[#allocation14 + $0xd0] sm:$0xff]
    %v819 = vld [vmem:[#allocation14 + $0xd8] sm:$0xff]
    %v820 = vld [vmem:[#allocation14 + $0xe0] sm:$0xff]
    %v821 = vld [vmem:[#allocation14 + $0xe8] sm:$0xff]
    %v822 = vld [vmem:[#allocation14 + $0xf0] sm:$0xff]
    %v823 = vld [vmem:[#allocation14 + $0xf8] sm:$0xff]
    %v824 = vld [vmem:[%s13] sm:$0x1]
    %v826 = vlaneseq
    %v827 = vshrl.u32 %v826, 7
    %v828 = vsub.s32 0, %v827
    %v829 = vrot.slane %v824, %v828
    %831 = vmatprep.subr.mxu0 0.0
    %832 = vmatpush1.msra.mxu0 %v807
    %833 = vmatprep.subr.mxu0 0.0
    %834 = vmatpush1.msra.mxu0 %v806
    %835 = vmatprep.subr.mxu0 0.0
    %836 = vmatpush1.msra.mxu0 %v805
    %837 = vmatprep.subr.mxu0 0.0
    %838 = vmatpush1.msra.mxu0 %v804
    %839 = vmatprep.subr.mxu0 0.0
    %840 = vmatpush1.msra.mxu0 %v803
    %841 = vmatprep.subr.mxu0 0.0
    %842 = vmatpush1.msra.mxu0 %v802
    %843 = vmatprep.subr.mxu0 0.0
    %844 = vmatpush1.msra.mxu0 %v801
    %845 = vmatprep.subr.mxu0 0.0
    %846 = vmatpush1.msra.mxu0 %v800
    %847 = vmatprep.subr.mxu0 0.0
    %848 = vmatpush1.msra.mxu0 %v799
    %849 = vmatprep.subr.mxu0 0.0
    %850 = vmatpush1.msra.mxu0 %v798
    %851 = vmatprep.subr.mxu0 0.0
    %852 = vmatpush1.msra.mxu0 %v797
    %853 = vmatprep.subr.mxu0 0.0
    %854 = vmatpush1.msra.mxu0 %v796
    %855 = vmatprep.subr.mxu0 0.0
    %856 = vmatpush1.msra.mxu0 %v795
    %857 = vmatprep.subr.mxu0 0.0
    %858 = vmatpush1.msra.mxu0 %v794
    %859 = vmatprep.subr.mxu0 0.0
    %860 = vmatpush1.msra.mxu0 %v793
    %861 = vmatprep.subr.mxu0 0.0
    %862 = vmatpush1.msra.mxu0 %v792
    %863 = vmatprep.subr.mxu0 0.0
    %864 = vmatpush2.msra.mxu0 %v823
    %865 = vmatprep.subr.mxu0 0.0
    %866 = vmatpush2.msra.mxu0 %v822
    %867 = vmatprep.subr.mxu0 0.0
    %868 = vmatpush2.msra.mxu0 %v821
    %869 = vmatprep.subr.mxu0 0.0
    %870 = vmatpush2.msra.mxu0 %v820
    %871 = vmatprep.subr.mxu0 0.0
    %872 = vmatpush2.msra.mxu0 %v819
    %873 = vmatprep.subr.mxu0 0.0
    %874 = vmatpush2.msra.mxu0 %v818
    %875 = vmatprep.subr.mxu0 0.0
    %876 = vmatpush2.msra.mxu0 %v817
    %877 = vmatprep.subr.mxu0 0.0
    %878 = vmatpush2.msra.mxu0 %v816
    %879 = vmatprep.subr.mxu0 0.0
    %880 = vmatpush2.msra.mxu0 %v815
    %881 = vmatprep.subr.mxu0 0.0
    %882 = vmatpush2.msra.mxu0 %v814
    %883 = vmatprep.subr.mxu0 0.0
    %884 = vmatpush2.msra.mxu0 %v813
    %885 = vmatprep.subr.mxu0 0.0
    %886 = vmatpush2.msra.mxu0 %v812
    %887 = vmatprep.subr.mxu0 0.0
    %888 = vmatpush2.msra.mxu0 %v811
    %889 = vmatprep.subr.mxu0 0.0
    %890 = vmatpush2.msra.mxu0 %v810
    %891 = vmatprep.subr.mxu0 0.0
    %892 = vmatpush2.msra.mxu0 %v809
    %893 = vmatprep.subr.mxu0 0.0
    %894 = vmatpush2.msra.mxu0 %v808
    %895 = vmatprep.mubr.f32.mxu0 %v342
    %896 = vmatmul.mubr.f32.gmra.mxu0 %v584
    %v897 = vpop.f32.mrf.mxu0
    %v898 = vadd.f32 %v829, %v897
    %v899 = vpop.f32.mrf.mxu0
    %900 = vdwg.mxu0
    %v901 = vmax.f32 %v784, 0.0
    %v902 = vmax.f32 %v789, 0.0
    %v903 = vadd.f32 %v243, %v901
    %v904 = vadd.f32 %v248, %v902
    %v905 = vmax.f32 %v898, 0.0
    %v906 = vadd.f32 %v342, %v905
    %907 = vmatprep.subr.mxu0 0.0
    %908 = vmatpush1.msra.mxu0 0.0
    %909 = vmatprep.subr.mxu0 0.0
    %910 = vmatpush1.msra.mxu0 0.0
    %911 = vmatprep.subr.mxu0 0.0
    %912 = vmatpush1.msra.mxu0 0.0
    %913 = vmatprep.subr.mxu0 0.0
    %914 = vmatpush1.msra.mxu0 0.0
    %915 = vmatprep.subr.mxu0 0.0
    %916 = vmatpush1.msra.mxu0 0.0
    %917 = vmatprep.subr.mxu0 0.0
    %918 = vmatpush1.msra.mxu0 0.0
    %919 = vmatprep.subr.mxu0 0.0
    %920 = vmatpush1.msra.mxu0 0.0
    %921 = vmatprep.subr.mxu0 0.0
    %922 = vmatpush1.msra.mxu0 0.0
    %923 = vmatprep.subr.mxu0 0.0
    %924 = vmatpush1.msra.mxu0 0.0
    %925 = vmatprep.subr.mxu0 0.0
    %926 = vmatpush1.msra.mxu0 0.0
    %927 = vmatprep.subr.mxu0 0.0
    %928 = vmatpush1.msra.mxu0 0.0
    %929 = vmatprep.subr.mxu0 0.0
    %930 = vmatpush1.msra.mxu0 0.0
    %931 = vmatprep.subr.mxu0 0.0
    %932 = vmatpush1.msra.mxu0 0.0
    %933 = vmatprep.subr.mxu0 0.0
    %934 = vmatpush1.msra.mxu0 0.0
    %935 = vmatprep.subr.mxu0 0.0
    %936 = vmatpush1.msra.mxu0 %v904
    %937 = vmatprep.subr.mxu0 0.0
    %938 = vmatpush1.msra.mxu0 %v903
    %939 = vmatprep.subr.mxu0 0.0
    %940 = vmatpush2.msra.mxu0 0.0
    %941 = vmatprep.subr.mxu0 0.0
    %942 = vmatpush2.msra.mxu0 0.0
    %943 = vmatprep.subr.mxu0 0.0
    %944 = vmatpush2.msra.mxu0 0.0
    %945 = vmatprep.subr.mxu0 0.0
    %946 = vmatpush2.msra.mxu0 0.0
    %947 = vmatprep.subr.mxu0 0.0
    %948 = vmatpush2.msra.mxu0 0.0
    %949 = vmatprep.subr.mxu0 0.0
    %950 = vmatpush2.msra.mxu0 0.0
    %951 = vmatprep.subr.mxu0 0.0
    %952 = vmatpush2.msra.mxu0 0.0
    %953 = vmatprep.subr.mxu0 0.0
    %954 = vmatpush2.msra.mxu0 0.0
    %955 = vmatprep.subr.mxu0 0.0
    %956 = vmatpush2.msra.mxu0 0.0
    %957 = vmatprep.subr.mxu0 0.0
    %958 = vmatpush2.msra.mxu0 0.0
    %959 = vmatprep.subr.mxu0 0.0
    %960 = vmatpush2.msra.mxu0 0.0
    %961 = vmatprep.subr.mxu0 0.0
    %962 = vmatpush2.msra.mxu0 0.0
    %963 = vmatprep.subr.mxu0 0.0
    %964 = vmatpush2.msra.mxu0 0.0
    %965 = vmatprep.subr.mxu0 0.0
    %966 = vmatpush2.msra.mxu0 0.0
    %967 = vmatprep.subr.mxu0 0.0
    %968 = vmatpush2.msra.mxu0 0.0
    %969 = vmatprep.subr.mxu0 0.0
    %970 = vmatpush2.msra.mxu0 0.0
    %971 = vmatprep.mubr.f32.mxu0 0.0
    %972 = vmatmul.mubr.f32.gmra.mxu0 %v352
    %v973 = vpop.f32.mrf.mxu0
    %v974 = vadd.f32 0.0, %v973
    %v975 = vpop.f32.mrf.mxu0
    %976 = vmatprep.mubr.f32.mxu0 0.0
    %977 = vmatmul.mubr.f32.gmra.mxu0 %v355
    %v978 = vpop.f32.mrf.mxu0
    %v979 = vadd.f32 0.0, %v978
    %v980 = vpop.f32.mrf.mxu0
    %981 = vdwg.mxu0
    %982 = vmatprep.subr.mxu0 0.0
    %983 = vmatpush1.msra.mxu0 0.0
    %984 = vmatprep.subr.mxu0 0.0
    %985 = vmatpush1.msra.mxu0 0.0
    %986 = vmatprep.subr.mxu0 0.0
    %987 = vmatpush1.msra.mxu0 0.0
    %988 = vmatprep.subr.mxu0 0.0
    %989 = vmatpush1.msra.mxu0 0.0
    %990 = vmatprep.subr.mxu0 0.0
    %991 = vmatpush1.msra.mxu0 0.0
    %992 = vmatprep.subr.mxu0 0.0
    %993 = vmatpush1.msra.mxu0 0.0
    %994 = vmatprep.subr.mxu0 0.0
    %995 = vmatpush1.msra.mxu0 0.0
    %996 = vmatprep.subr.mxu0 0.0
    %997 = vmatpush1.msra.mxu0 0.0
    %998 = vmatprep.subr.mxu0 0.0
    %999 = vmatpush1.msra.mxu0 0.0
    %1000 = vmatprep.subr.mxu0 0.0
    %1001 = vmatpush1.msra.mxu0 0.0
    %1002 = vmatprep.subr.mxu0 0.0
    %1003 = vmatpush1.msra.mxu0 0.0
    %1004 = vmatprep.subr.mxu0 0.0
    %1005 = vmatpush1.msra.mxu0 0.0
    %1006 = vmatprep.subr.mxu0 0.0
    %1007 = vmatpush1.msra.mxu0 0.0
    %1008 = vmatprep.subr.mxu0 0.0
    %1009 = vmatpush1.msra.mxu0 0.0
    %1010 = vmatprep.subr.mxu0 0.0
    %1011 = vmatpush1.msra.mxu0 0.0
    %1012 = vmatprep.subr.mxu0 0.0
    %1013 = vmatpush1.msra.mxu0 %v906
    %1014 = vmatprep.subr.mxu0 0.0
    %1015 = vmatpush2.msra.mxu0 0.0
    %1016 = vmatprep.subr.mxu0 0.0
    %1017 = vmatpush2.msra.mxu0 0.0
    %1018 = vmatprep.subr.mxu0 0.0
    %1019 = vmatpush2.msra.mxu0 0.0
    %1020 = vmatprep.subr.mxu0 0.0
    %1021 = vmatpush2.msra.mxu0 0.0
    %1022 = vmatprep.subr.mxu0 0.0
    %1023 = vmatpush2.msra.mxu0 0.0
    %1024 = vmatprep.subr.mxu0 0.0
    %1025 = vmatpush2.msra.mxu0 0.0
    %1026 = vmatprep.subr.mxu0 0.0
    %1027 = vmatpush2.msra.mxu0 0.0
    %1028 = vmatprep.subr.mxu0 0.0
    %1029 = vmatpush2.msra.mxu0 0.0
    %1030 = vmatprep.subr.mxu0 0.0
    %1031 = vmatpush2.msra.mxu0 0.0
    %1032 = vmatprep.subr.mxu0 0.0
    %1033 = vmatpush2.msra.mxu0 0.0
    %1034 = vmatprep.subr.mxu0 0.0
    %1035 = vmatpush2.msra.mxu0 0.0
    %1036 = vmatprep.subr.mxu0 0.0
    %1037 = vmatpush2.msra.mxu0 0.0
    %1038 = vmatprep.subr.mxu0 0.0
    %1039 = vmatpush2.msra.mxu0 0.0
    %1040 = vmatprep.subr.mxu0 0.0
    %1041 = vmatpush2.msra.mxu0 0.0
    %1042 = vmatprep.subr.mxu0 0.0
    %1043 = vmatpush2.msra.mxu0 0.0
    %1044 = vmatprep.subr.mxu0 0.0
    %1045 = vmatpush2.msra.mxu0 0.0
    %1046 = vmatprep.mubr.f32.mxu0 0.0
    %1047 = vmatmul.mubr.f32.gmra.mxu0 %v434
    %v1048 = vpop.f32.mrf.mxu0
    %v1049 = vadd.f32 0.0, %v1048
    %v1050 = vpop.f32.mrf.mxu0
    %1051 = vmatprep.mubr.f32.mxu0 0.0
    %1052 = vmatmul.mubr.f32.gmra.mxu0 %v437
    %v1053 = vpop.f32.mrf.mxu0
    %v1054 = vadd.f32 0.0, %v1053
    %v1055 = vpop.f32.mrf.mxu0
    %1056 = vdwg.mxu0
    %s1057 = scalar_lea.vmem [#allocation13], 384
    %v1058 = vld [vmem:[%s1057] sm:$0xff]
    %v1059 = vld [vmem:[%s1057 + $0x8] sm:$0xff]
    %v1060 = vld [vmem:[%s1057 + $0x10] sm:$0xff]
    %v1061 = vld [vmem:[%s1057 + $0x18] sm:$0xff]
    %v1062 = vld [vmem:[%s1057 + $0x20] sm:$0xff]
    %v1063 = vld [vmem:[%s1057 + $0x28] sm:$0xff]
    %v1064 = vld [vmem:[%s1057 + $0x30] sm:$0xff]
    %v1065 = vld [vmem:[%s1057 + $0x38] sm:$0xff]
    %v1066 = vld [vmem:[%s1057 + $0x40] sm:$0xff]
    %v1067 = vld [vmem:[%s1057 + $0x48] sm:$0xff]
    %v1068 = vld [vmem:[%s1057 + $0x50] sm:$0xff]
    %v1069 = vld [vmem:[%s1057 + $0x58] sm:$0xff]
    %v1070 = vld [vmem:[%s1057 + $0x60] sm:$0xff]
    %v1071 = vld [vmem:[%s1057 + $0x68] sm:$0xff]
    %v1072 = vld [vmem:[%s1057 + $0x70] sm:$0xff]
    %v1073 = vld [vmem:[%s1057 + $0x78] sm:$0xff]
    %v1074 = vld [vmem:[%s1057 + $0x80] sm:$0xff]
    %v1075 = vld [vmem:[%s1057 + $0x88] sm:$0xff]
    %v1076 = vld [vmem:[%s1057 + $0x90] sm:$0xff]
    %v1077 = vld [vmem:[%s1057 + $0x98] sm:$0xff]
    %v1078 = vld [vmem:[%s1057 + $0xa0] sm:$0xff]
    %v1079 = vld [vmem:[%s1057 + $0xa8] sm:$0xff]
    %v1080 = vld [vmem:[%s1057 + $0xb0] sm:$0xff]
    %v1081 = vld [vmem:[%s1057 + $0xb8] sm:$0xff]
    %v1082 = vld [vmem:[%s1057 + $0xc0] sm:$0xff]
    %v1083 = vld [vmem:[%s1057 + $0xc8] sm:$0xff]
    %v1084 = vld [vmem:[%s1057 + $0xd0] sm:$0xff]
    %v1085 = vld [vmem:[%s1057 + $0xd8] sm:$0xff]
    %v1086 = vld [vmem:[%s1057 + $0xe0] sm:$0xff]
    %v1087 = vld [vmem:[%s1057 + $0xe8] sm:$0xff]
    %v1088 = vld [vmem:[%s1057 + $0xf0] sm:$0xff]
    %v1089 = vld [vmem:[%s1057 + $0xf8] sm:$0xff]
    %v1090 = vld [vmem:[%s1057 + $0x100] sm:$0xff]
    %v1091 = vld [vmem:[%s1057 + $0x108] sm:$0xff]
    %v1092 = vld [vmem:[%s1057 + $0x110] sm:$0xff]
    %v1093 = vld [vmem:[%s1057 + $0x118] sm:$0xff]
    %v1094 = vld [vmem:[%s1057 + $0x120] sm:$0xff]
    %v1095 = vld [vmem:[%s1057 + $0x128] sm:$0xff]
    %v1096 = vld [vmem:[%s1057 + $0x130] sm:$0xff]
    %v1097 = vld [vmem:[%s1057 + $0x138] sm:$0xff]
    %v1098 = vld [vmem:[%s1057 + $0x140] sm:$0xff]
    %v1099 = vld [vmem:[%s1057 + $0x148] sm:$0xff]
    %v1100 = vld [vmem:[%s1057 + $0x150] sm:$0xff]
    %v1101 = vld [vmem:[%s1057 + $0x158] sm:$0xff]
    %v1102 = vld [vmem:[%s1057 + $0x160] sm:$0xff]
    %v1103 = vld [vmem:[%s1057 + $0x168] sm:$0xff]
    %v1104 = vld [vmem:[%s1057 + $0x170] sm:$0xff]
    %v1105 = vld [vmem:[%s1057 + $0x178] sm:$0xff]
    %s1106 = scalar_lea.vmem %s11, 1
    %v1107 = vld [vmem:[%s1106] sm:$0x1]
    %v1109 = vlaneseq
    %v1110 = vshrl.u32 %v1109, 7
    %v1111 = vsub.s32 0, %v1110
    %v1112 = vrot.slane %v1107, %v1111
    %1114 = vmatprep.subr.mxu0 0.0
    %1115 = vmatpush1.msra.mxu0 %v1073
    %1116 = vmatprep.subr.mxu0 0.0
    %1117 = vmatpush1.msra.mxu0 %v1072
    %1118 = vmatprep.subr.mxu0 0.0
    %1119 = vmatpush1.msra.mxu0 %v1071
    %1120 = vmatprep.subr.mxu0 0.0
    %1121 = vmatpush1.msra.mxu0 %v1070
    %1122 = vmatprep.subr.mxu0 0.0
    %1123 = vmatpush1.msra.mxu0 %v1069
    %1124 = vmatprep.subr.mxu0 0.0
    %1125 = vmatpush1.msra.mxu0 %v1068
    %1126 = vmatprep.subr.mxu0 0.0
    %1127 = vmatpush1.msra.mxu0 %v1067
    %1128 = vmatprep.subr.mxu0 0.0
    %1129 = vmatpush1.msra.mxu0 %v1066
    %1130 = vmatprep.subr.mxu0 0.0
    %1131 = vmatpush1.msra.mxu0 %v1065
    %1132 = vmatprep.subr.mxu0 0.0
    %1133 = vmatpush1.msra.mxu0 %v1064
    %1134 = vmatprep.subr.mxu0 0.0
    %1135 = vmatpush1.msra.mxu0 %v1063
    %1136 = vmatprep.subr.mxu0 0.0
    %1137 = vmatpush1.msra.mxu0 %v1062
    %1138 = vmatprep.subr.mxu0 0.0
    %1139 = vmatpush1.msra.mxu0 %v1061
    %1140 = vmatprep.subr.mxu0 0.0
    %1141 = vmatpush1.msra.mxu0 %v1060
    %1142 = vmatprep.subr.mxu0 0.0
    %1143 = vmatpush1.msra.mxu0 %v1059
    %1144 = vmatprep.subr.mxu0 0.0
    %1145 = vmatpush1.msra.mxu0 %v1058
    %1146 = vmatprep.subr.mxu0 0.0
    %1147 = vmatpush2.msra.mxu0 %v1089
    %1148 = vmatprep.subr.mxu0 0.0
    %1149 = vmatpush2.msra.mxu0 %v1088
    %1150 = vmatprep.subr.mxu0 0.0
    %1151 = vmatpush2.msra.mxu0 %v1087
    %1152 = vmatprep.subr.mxu0 0.0
    %1153 = vmatpush2.msra.mxu0 %v1086
    %1154 = vmatprep.subr.mxu0 0.0
    %1155 = vmatpush2.msra.mxu0 %v1085
    %1156 = vmatprep.subr.mxu0 0.0
    %1157 = vmatpush2.msra.mxu0 %v1084
    %1158 = vmatprep.subr.mxu0 0.0
    %1159 = vmatpush2.msra.mxu0 %v1083
    %1160 = vmatprep.subr.mxu0 0.0
    %1161 = vmatpush2.msra.mxu0 %v1082
    %1162 = vmatprep.subr.mxu0 0.0
    %1163 = vmatpush2.msra.mxu0 %v1081
    %1164 = vmatprep.subr.mxu0 0.0
    %1165 = vmatpush2.msra.mxu0 %v1080
    %1166 = vmatprep.subr.mxu0 0.0
    %1167 = vmatpush2.msra.mxu0 %v1079
    %1168 = vmatprep.subr.mxu0 0.0
    %1169 = vmatpush2.msra.mxu0 %v1078
    %1170 = vmatprep.subr.mxu0 0.0
    %1171 = vmatpush2.msra.mxu0 %v1077
    %1172 = vmatprep.subr.mxu0 0.0
    %1173 = vmatpush2.msra.mxu0 %v1076
    %1174 = vmatprep.subr.mxu0 0.0
    %1175 = vmatpush2.msra.mxu0 %v1075
    %1176 = vmatprep.subr.mxu0 0.0
    %1177 = vmatpush2.msra.mxu0 %v1074
    %1178 = vmatprep.mubr.f32.mxu0 %v1049
    %1179 = vmatmul.mubr.f32.gmra.mxu0 %v974
    %v1180 = vpop.f32.mrf.mxu0
    %v1181 = vadd.f32 %v1112, %v1180
    %v1182 = vpop.f32.mrf.mxu0
    %1183 = vmatprep.mubr.f32.mxu0 %v1054
    %1184 = vmatmul.mubr.f32.gmra.mxu0 %v979
    %v1185 = vpop.f32.mrf.mxu0
    %v1186 = vadd.f32 %v1112, %v1185
    %v1187 = vpop.f32.mrf.mxu0
    %1188 = vdwg.mxu0
    %1189 = vmatprep.subr.mxu0 0.0
    %1190 = vmatpush1.msra.mxu0 %v1105
    %1191 = vmatprep.subr.mxu0 0.0
    %1192 = vmatpush1.msra.mxu0 %v1104
    %1193 = vmatprep.subr.mxu0 0.0
    %1194 = vmatpush1.msra.mxu0 %v1103
    %1195 = vmatprep.subr.mxu0 0.0
    %1196 = vmatpush1.msra.mxu0 %v1102
    %1197 = vmatprep.subr.mxu0 0.0
    %1198 = vmatpush1.msra.mxu0 %v1101
    %1199 = vmatprep.subr.mxu0 0.0
    %1200 = vmatpush1.msra.mxu0 %v1100
    %1201 = vmatprep.subr.mxu0 0.0
    %1202 = vmatpush1.msra.mxu0 %v1099
    %1203 = vmatprep.subr.mxu0 0.0
    %1204 = vmatpush1.msra.mxu0 %v1098
    %1205 = vmatprep.subr.mxu0 0.0
    %1206 = vmatpush1.msra.mxu0 %v1097
    %1207 = vmatprep.subr.mxu0 0.0
    %1208 = vmatpush1.msra.mxu0 %v1096
    %1209 = vmatprep.subr.mxu0 0.0
    %1210 = vmatpush1.msra.mxu0 %v1095
    %1211 = vmatprep.subr.mxu0 0.0
    %1212 = vmatpush1.msra.mxu0 %v1094
    %1213 = vmatprep.subr.mxu0 0.0
    %1214 = vmatpush1.msra.mxu0 %v1093
    %1215 = vmatprep.subr.mxu0 0.0
    %1216 = vmatpush1.msra.mxu0 %v1092
    %1217 = vmatprep.subr.mxu0 0.0
    %1218 = vmatpush1.msra.mxu0 %v1091
    %1219 = vmatprep.subr.mxu0 0.0
    %1220 = vmatpush1.msra.mxu0 %v1090
    %1221 = vmatprep.subr.mxu0 0.0
    %1222 = vmatpush2.msra.mxu0 0.0
    %1223 = vmatprep.subr.mxu0 0.0
    %1224 = vmatpush2.msra.mxu0 0.0
    %1225 = vmatprep.subr.mxu0 0.0
    %1226 = vmatpush2.msra.mxu0 0.0
    %1227 = vmatprep.subr.mxu0 0.0
    %1228 = vmatpush2.msra.mxu0 0.0
    %1229 = vmatprep.subr.mxu0 0.0
    %1230 = vmatpush2.msra.mxu0 0.0
    %1231 = vmatprep.subr.mxu0 0.0
    %1232 = vmatpush2.msra.mxu0 0.0
    %1233 = vmatprep.subr.mxu0 0.0
    %1234 = vmatpush2.msra.mxu0 0.0
    %1235 = vmatprep.subr.mxu0 0.0
    %1236 = vmatpush2.msra.mxu0 0.0
    %1237 = vmatprep.subr.mxu0 0.0
    %1238 = vmatpush2.msra.mxu0 0.0
    %1239 = vmatprep.subr.mxu0 0.0
    %1240 = vmatpush2.msra.mxu0 0.0
    %1241 = vmatprep.subr.mxu0 0.0
    %1242 = vmatpush2.msra.mxu0 0.0
    %1243 = vmatprep.subr.mxu0 0.0
    %1244 = vmatpush2.msra.mxu0 0.0
    %1245 = vmatprep.subr.mxu0 0.0
    %1246 = vmatpush2.msra.mxu0 0.0
    %1247 = vmatprep.subr.mxu0 0.0
    %1248 = vmatpush2.msra.mxu0 0.0
    %1249 = vmatprep.subr.mxu0 0.0
    %1250 = vmatpush2.msra.mxu0 0.0
    %1251 = vmatprep.subr.mxu0 0.0
    %1252 = vmatpush2.msra.mxu0 0.0
    %1253 = vmatprep.mubr.f32.mxu0 0.0
    %1254 = vmatmul.mubr.f32.gmra.mxu0 %v903
    %v1255 = vpop.f32.mrf.mxu0
    %v1256 = vadd.f32 %v1181, %v1255
    %v1257 = vpop.f32.mrf.mxu0
    %1258 = vmatprep.mubr.f32.mxu0 0.0
    %1259 = vmatmul.mubr.f32.gmra.mxu0 %v904
    %v1260 = vpop.f32.mrf.mxu0
    %v1261 = vadd.f32 %v1186, %v1260
    %v1262 = vpop.f32.mrf.mxu0
    %1263 = vdwg.mxu0
    %v1264 = vmax.f32 %v1256, 0.0
    %v1265 = vmax.f32 %v1261, 0.0
    %v1266 = vadd.f32 %v903, %v1264
    %v1267 = vadd.f32 %v904, %v1265
    %1268 = vst [vmem:[#allocation16] sm:$0xff] %v1266
    %1269 = vst [vmem:[#allocation16 + $0x8] sm:$0xff] %v1267
    %v1270 = vld [vmem:[%s9] sm:$0xff]
    %v1272 = vsel %vm350, %v1270, 0
    %1274 = vmatprep.subr.mxu0 0.0
    %1275 = vmatpush1.msra.mxu0 0.0
    %1276 = vmatprep.subr.mxu0 0.0
    %1277 = vmatpush1.msra.mxu0 0.0
    %1278 = vmatprep.subr.mxu0 0.0
    %1279 = vmatpush1.msra.mxu0 0.0
    %1280 = vmatprep.subr.mxu0 0.0
    %1281 = vmatpush1.msra.mxu0 0.0
    %1282 = vmatprep.subr.mxu0 0.0
    %1283 = vmatpush1.msra.mxu0 0.0
    %1284 = vmatprep.subr.mxu0 0.0
    %1285 = vmatpush1.msra.mxu0 0.0
    %1286 = vmatprep.subr.mxu0 0.0
    %1287 = vmatpush1.msra.mxu0 0.0
    %1288 = vmatprep.subr.mxu0 0.0
    %1289 = vmatpush1.msra.mxu0 0.0
    %1290 = vmatprep.subr.mxu0 0.0
    %1291 = vmatpush1.msra.mxu0 0.0
    %1292 = vmatprep.subr.mxu0 0.0
    %1293 = vmatpush1.msra.mxu0 0.0
    %1294 = vmatprep.subr.mxu0 0.0
    %1295 = vmatpush1.msra.mxu0 0.0
    %1296 = vmatprep.subr.mxu0 0.0
    %1297 = vmatpush1.msra.mxu0 0.0
    %1298 = vmatprep.subr.mxu0 0.0
    %1299 = vmatpush1.msra.mxu0 0.0
    %1300 = vmatprep.subr.mxu0 0.0
    %1301 = vmatpush1.msra.mxu0 0.0
    %1302 = vmatprep.subr.mxu0 0.0
    %1303 = vmatpush1.msra.mxu0 %v1267
    %1304 = vmatprep.subr.mxu0 0.0
    %1305 = vmatpush1.msra.mxu0 %v1266
    %1306 = vmatprep.subr.mxu0 0.0
    %1307 = vmatpush2.msra.mxu0 0.0
    %1308 = vmatprep.subr.mxu0 0.0
    %1309 = vmatpush2.msra.mxu0 0.0
    %1310 = vmatprep.subr.mxu0 0.0
    %1311 = vmatpush2.msra.mxu0 0.0
    %1312 = vmatprep.subr.mxu0 0.0
    %1313 = vmatpush2.msra.mxu0 0.0
    %1314 = vmatprep.subr.mxu0 0.0
    %1315 = vmatpush2.msra.mxu0 0.0
    %1316 = vmatprep.subr.mxu0 0.0
    %1317 = vmatpush2.msra.mxu0 0.0
    %1318 = vmatprep.subr.mxu0 0.0
    %1319 = vmatpush2.msra.mxu0 0.0
    %1320 = vmatprep.subr.mxu0 0.0
    %1321 = vmatpush2.msra.mxu0 0.0
    %1322 = vmatprep.subr.mxu0 0.0
    %1323 = vmatpush2.msra.mxu0 0.0
    %1324 = vmatprep.subr.mxu0 0.0
    %1325 = vmatpush2.msra.mxu0 0.0
    %1326 = vmatprep.subr.mxu0 0.0
    %1327 = vmatpush2.msra.mxu0 0.0
    %1328 = vmatprep.subr.mxu0 0.0
    %1329 = vmatpush2.msra.mxu0 0.0
    %1330 = vmatprep.subr.mxu0 0.0
    %1331 = vmatpush2.msra.mxu0 0.0
    %1332 = vmatprep.subr.mxu0 0.0
    %1333 = vmatpush2.msra.mxu0 0.0
    %1334 = vmatprep.subr.mxu0 0.0
    %1335 = vmatpush2.msra.mxu0 0.0
    %1336 = vmatprep.subr.mxu0 0.0
    %1337 = vmatpush2.msra.mxu0 0.0
    %1338 = vmatprep.mubr.f32.mxu0 0.0
    %1339 = vmatmul.mubr.f32.gmra.mxu0 %v1272
    %v1340 = vpop.f32.mrf.mxu0
    %v1341 = vadd.f32 0.0, %v1340
    %v1342 = vpop.f32.mrf.mxu0
    %1343 = vdwg.mxu0
    %1344 = vst [vmem:[%s15] sm:$0xff] %v1341
    // Predicated region
    $region90: #{virtual_gnn_forward.1} parent=1 // pred_check
      _
    $region91: #{virtual_gnn_forward.1} parent=1 // pred_check_branch
      %1346 = sbr.rel (0) target = $region93
    $region92: #{virtual_gnn_forward.1} parent=1 // pred_region
      %s1348 = ssub.s32 256, 256
      %1349 = vsyncadd [#allocation4], %s1348
      %s1350 = sshll.u32 [#allocation16], 4
      %s1351 = int_to_ptr.vmem [resolvable:$true] %s1350
      %1356 = dma.vmem_to_hbm [thread:$0]  %s1351, 256, %s14, [#allocation4], 128, 128, 8
    $region93: #{virtual_gnn_forward.1} parent=1 // pred_fallthru
      _
    // Predicated region
    $region94: #{virtual_gnn_forward.1} parent=1 // pred_check
      _
    $region95: #{virtual_gnn_forward.1} parent=1 // pred_check_branch
      %1358 = sbr.rel (0) target = $region97
    $region96: #{virtual_gnn_forward.1} parent=1 // pred_region
      _
    $region97: #{virtual_gnn_forward.1} parent=1 // pred_fallthru
      _
    // Predicated region
    $region98: #{virtual_gnn_forward.1} parent=1 // pred_check
      _
    $region99: #{virtual_gnn_forward.1} parent=1 // pred_check_branch
      %1360 = sbr.rel (0) target = $region101
    $region100: #{virtual_gnn_forward.1} parent=1 // pred_region
      %1361 = dma.done [#allocation4], 256
    $region101: #{virtual_gnn_forward.1} parent=1 // pred_fallthru
      _
    // Predicated region
    $region102: #{virtual_gnn_forward.1} parent=1 // pred_check
      _
    $region103: #{virtual_gnn_forward.1} parent=1 // pred_check_branch
      %1363 = sbr.rel (0) target = $region105
    $region104: #{virtual_gnn_forward.1} parent=1 // pred_region
      _
    $region105: #{virtual_gnn_forward.1} parent=1 // pred_fallthru
      _
    %1364 = vsyncpa [#allocation3], 1
    %1365 = vsyncpa [#allocation6], 1
    %1366 = vsyncpa [#allocation9], 1
    %1367 = vsyncpa [#allocation12], 1
    %1368 = vsyncpa [#allocation15], 1
    %1369 = vsyncpa [#allocation4], 1

</llo_original>
